<compile_context>
chip_gen: v6e
topology: v6e:2x2x1
jax: 0.10.0
libtpu: 0.0.40
codegen_flags: <defaults>
</compile_context>

<pallas_src>
import functools

import jax
import jax.numpy as jnp
from jax.experimental import pallas as pl
from jax.experimental.pallas import tpu as pltpu


def _round_up(x, m):
    return ((x + m - 1) // m) * m


def _seq_self_attn_kernel(q_ref, kT_ref, xv_ref, wa_ref, o_ref,
                          m_sc, l_sc, acc_sc, *, seq_len, apply_mask, tanh_dtype):
    """Grid = (batch, q_tile, k_tile); k_tile is the innermost ('arbitrary') axis."""
    ki = pl.program_id(2)

    # --- init online-softmax state at the first key tile --------------------------------
    @pl.when(ki == 0)
    def _():
        m_sc[...] = jnp.full_like(m_sc, -jnp.inf)
        l_sc[...] = jnp.zeros_like(l_sc)
        acc_sc[...] = jnp.zeros_like(acc_sc)

    tq = q_ref.shape[1]
    units = q_ref.shape[2]
    tk = kT_ref.shape[2]

    qblk = q_ref[0]      # (Tq, U) f32  pre-projected queries (x @ Wt)
    kblk = kT_ref[0]     # (U, Tk) f32  pre-projected keys (x @ Wx + bh); keys on lanes

    # --- additive emission: e[i,j] = sum_u Wa[u] * tanh(q[i,u] + k[u,j]) ----------------
    # Per-u accumulation keeps the live set at ~2 (Tq, Tk) register tiles instead of a
    # fully materialized (U, Tq, Tk) VMEM-spilled intermediate.  wa[u] is a scalar SMEM
    # read feeding the VALU FMA.  (`+ ba` intentionally dropped: softmax shift-invariant.)
    e = jnp.zeros((tq, tk), jnp.float32)
    for u in range(units):   # static unroll -> full LLO scheduling visibility
        h = jnp.tanh((qblk[:, u:u + 1] + kblk[u:u + 1, :]).astype(tanh_dtype))
        e = e + wa_ref[u] * h.astype(jnp.float32)

    if apply_mask:
        # Keys beyond the true sequence length (wrapper padding) get -1e30 logits.
        pos = ki * tk + jax.lax.broadcasted_iota(jnp.int32, (1, tk), 1)
        e = jnp.where(pos < seq_len, e, -1e30)

    # --- flash-style online softmax over key tiles ---------------------------------------
    m_prev = m_sc[...]                                                   # (Tq, 1)
    m_new = jnp.maximum(m_prev, jnp.max(e, axis=-1, keepdims=True))
    alpha = jnp.exp(m_prev - m_new)
    p = jnp.exp(e - m_new)                                               # (Tq, Tk)
    l_sc[...] = alpha * l_sc[...] + jnp.sum(p, axis=-1, keepdims=True)
    xv = xv_ref[0]                                                       # (Tk, F_pad)
    acc_sc[...] = alpha * acc_sc[...] + jnp.dot(
        p.astype(xv.dtype), xv, preferred_element_type=jnp.float32)      # (Tq, F_pad)
    m_sc[...] = m_new

    # --- finalize at the last key tile ----------------------------------------------------
    @pl.when(ki == pl.num_programs(2) - 1)
    def _():
        inv = pl.reciprocal(l_sc[...], approx=False)   # exact; once per query tile
        o_ref[0] = (acc_sc[...] * inv).astype(o_ref.dtype)


def seq_self_attention(x, Wt, Wx, bh, Wa, ba=None, *, tile=128, tanh_dtype=jnp.float32):
    """x: (B, T, F); Wt, Wx: (F, U); bh: (U,); Wa: (U, 1); ba: (1,) (unused: softmax-invariant)."""
    del ba  # constant logit shift; cancelled exactly by the softmax max-subtraction
    B, T, F = x.shape
    U = Wt.shape[1]
    f32 = jnp.float32

    # Tile sizes: 128 keeps the (Tq, Tk) logit accumulator register-resident through the
    # per-u emission loop; the kernel is EUP(tanh)-bound, so step overhead is amortized.
    tq = tk = min(tile, _round_up(T, 8))
    t_pad = _round_up(T, tq)
    f_pad = _round_up(F, 128)          # lane-dense value loads / output stores

    # Pre-project Q and K once (O(B*T*F*U) total, not per tile).  K is laid out (B, U, T)
    # so keys land on the lane axis in-kernel; bh is folded into K here, once.
    q = jnp.einsum("btf,fu->btu", x, Wt, preferred_element_type=f32)
    kT = (jnp.einsum("btf,fu->but", x, Wx, preferred_element_type=f32)
          + bh.astype(f32)[None, :, None])

    if t_pad != T:
        q = jnp.pad(q, ((0, 0), (0, t_pad - T), (0, 0)))
        kT = jnp.pad(kT, ((0, 0), (0, 0), (0, t_pad - T)))
    xv = x
    if t_pad != T or f_pad != F:
        xv = jnp.pad(x, ((0, 0), (0, t_pad - T), (0, f_pad - F)))

    wa = Wa.reshape(U).astype(f32)     # SMEM scalars for the per-u FMA

    grid = (B, t_pad // tq, t_pad // tk)
    kernel = functools.partial(_seq_self_attn_kernel, seq_len=T,
                               apply_mask=(t_pad != T), tanh_dtype=tanh_dtype)

    out = pl.pallas_call(
        kernel,
        out_shape=jax.ShapeDtypeStruct((B, t_pad, f_pad), x.dtype),
        grid_spec=pltpu.PrefetchScalarGridSpec(
            num_scalar_prefetch=0,
            grid=grid,
            in_specs=[
                pl.BlockSpec((1, tq, U), lambda b, qi, ki: (b, qi, 0)),      # Q (resident over ki)
                pl.BlockSpec((1, U, tk), lambda b, qi, ki: (b, 0, ki)),      # K^T (keys on lanes)
                pl.BlockSpec((1, tk, f_pad), lambda b, qi, ki: (b, ki, 0)),  # values (x, padded)
                pl.BlockSpec(memory_space=pltpu.MemorySpace.SMEM),           # wa scalars
            ],
            out_specs=pl.BlockSpec((1, tq, f_pad), lambda b, qi, ki: (b, qi, 0)),
            scratch_shapes=[
                pltpu.VMEM((tq, 1), jnp.float32),       # running row max  m
                pltpu.VMEM((tq, 1), jnp.float32),       # running row sum  l
                pltpu.VMEM((tq, f_pad), jnp.float32),   # output accumulator
            ],
        ),
        compiler_params=pltpu.CompilerParams(
            # batch and query tiles are independent -> megacore / dual-TC sharding;
            # key tiles carry the online-softmax state -> arbitrary.
            dimension_semantics=("parallel", "parallel", "arbitrary"),
        ),
    )(q, kT, xv, wa)

    return out[:, :T, :F]


def _reference(x, Wt, Wx, bh, Wa, ba):
    """Pure-JAX port of the PyTorch forward (includes bh AND ba, no folding)."""
    q = jnp.einsum("btf,fu->btu", x, Wt)[:, :, None, :]
    k = jnp.einsum("btf,fu->btu", x, Wx)[:, None, :, :]
    h = jnp.tanh(q + k + bh)
    e = jnp.einsum("bqku,uo->bqko", h, Wa)[..., 0] + ba[0]
    e = jnp.exp(e - jnp.max(e, axis=-1, keepdims=True))
    a = e / jnp.sum(e, axis=-1, keepdims=True)
    return jnp.einsum("bqk,bkf->bqf", a, x)


def _xavier_uniform(key, shape, dtype=jnp.float32):
    fan_in, fan_out = shape[0], shape[1]
    bound = (6.0 / (fan_in + fan_out)) ** 0.5
    return jax.random.uniform(key, shape, dtype, minval=-bound, maxval=bound)


if __name__ == "__main__":
    B, T, F, U = 2, 8, 16, 32   # batch, seq, in_features, out_features(units)

    key = jax.random.PRNGKey(0)
    kx, kwt, kwx, kwa, kb, kx2, kx3 = jax.random.split(key, 7)

    x = jax.random.normal(kx, (B, T, F), dtype=jnp.float32)

    # Parameter init mirroring the module's _build/_reset_parameters (bh, ba stay zero).
    Wt = _xavier_uniform(kwt, (F, U))
    Wx = _xavier_uniform(kwx, (F, U))
    Wa = _xavier_uniform(kwa, (U, 1))
    bh = jnp.zeros((U,), jnp.float32)
    ba = jnp.zeros((1,), jnp.float32)

    out = jax.block_until_ready(seq_self_attention(x, Wt, Wx, bh, Wa, ba))
    ref = _reference(x, Wt, Wx, bh, Wa, ba)
    assert out.shape == (B, T, F)
    assert jnp.allclose(out, ref, atol=1e-4, rtol=1e-4), "mismatch vs JAX reference (small)"

    # Multi-tile path: several key tiles (online softmax steps) and query tiles, with
    # non-zero (trained-like) bh / ba exercising the bias folding / ba-drop.
    T2 = 256
    x2 = jax.random.normal(kx2, (B, T2, F), dtype=jnp.float32)
    bh2 = 0.1 * jax.random.normal(kb, (U,), dtype=jnp.float32)
    ba2 = jnp.array([0.37], jnp.float32)
    out2 = jax.block_until_ready(seq_self_attention(x2, Wt, Wx, bh2, Wa, ba2))
    ref2 = _reference(x2, Wt, Wx, bh2, Wa, ba2)
    assert out2.shape == (B, T2, F)
    assert jnp.allclose(out2, ref2, atol=1e-4, rtol=1e-4), "mismatch vs JAX reference (tiled)"

    # Non-multiple-of-128 sequence length: exercises the wrapper T-padding + in-kernel
    # key masking path.
    T3 = 200
    x3 = jax.random.normal(kx3, (B, T3, F), dtype=jnp.float32)
    out3 = jax.block_until_ready(seq_self_attention(x3, Wt, Wx, bh2, Wa, ba2))
    ref3 = _reference(x3, Wt, Wx, bh2, Wa, ba2)
    assert out3.shape == (B, T3, F)
    assert jnp.allclose(out3, ref3, atol=1e-4, rtol=1e-4), "mismatch vs JAX reference (masked)"

    print("KERNEL_OK")
</pallas_src>

<mosaic_0001>
module attributes {stable_mosaic.version = 11 : i64} {
  func.func @_seq_self_attn_kernel(%arg0: i32, %arg1: i32, %arg2: i32, %arg3: memref<1x8x32xf32, #tpu.memory_space<vmem>>, %arg4: memref<1x32x8xf32, #tpu.memory_space<vmem>>, %arg5: memref<1x8x128xf32, #tpu.memory_space<vmem>>, %arg6: memref<32xf32, #tpu.memory_space<smem>>, %arg7: memref<1x8x128xf32, #tpu.memory_space<vmem>>, %arg8: memref<8x1xf32, #tpu.memory_space<vmem>>, %arg9: memref<8x1xf32, #tpu.memory_space<vmem>>, %arg10: memref<8x128xf32, #tpu.memory_space<vmem>>) attributes {dimension_semantics = [#tpu.dimension_semantics<parallel>, #tpu.dimension_semantics<parallel>, #tpu.dimension_semantics<arbitrary>], iteration_bounds = array<i64: 2, 1, 1>, scalar_prefetch = 0 : i64, scratch_operands = 3 : i64, tpu.core_type = #tpu.core_type<tc>, window_params = [{transform_indices = @transform_0, window_bounds = array<i64: 1, 8, 32>}, {transform_indices = @transform_1, window_bounds = array<i64: 1, 32, 8>}, {transform_indices = @transform_2, window_bounds = array<i64: 1, 8, 128>}, {transform_indices = @transform_3, window_bounds = array<i64: 32>}, {transform_indices = @transform_4, window_bounds = array<i64: 1, 8, 128>}]} {
    %c0_i32 = arith.constant 0 : i32
    %0 = arith.cmpi eq, %arg2, %c0_i32 : i32
    %1 = arith.extui %0 : i1 to i32
    %c0_i32_0 = arith.constant 0 : i32
    %2 = arith.cmpi ne, %1, %c0_i32_0 : i32
    scf.if %2 {
      %cst_27 = arith.constant 0xFF800000 : f32
      %355 = vector.broadcast %cst_27 : f32 to vector<8x1xf32>
      %c0_28 = arith.constant 0 : index
      %c0_29 = arith.constant 0 : index
      %356 = vector.load %arg8[%c0_28, %c0_29] : memref<8x1xf32, #tpu.memory_space<vmem>>, vector<8x1xf32>
      tpu.vector_store %arg8[%c0_28, %c0_29], %355 {strides = array<i32>} : memref<8x1xf32, #tpu.memory_space<vmem>>, vector<8x1xf32>,
      %cst_30 = arith.constant 0.000000e+00 : f32
      %357 = vector.broadcast %cst_30 : f32 to vector<8x1xf32>
      %c0_31 = arith.constant 0 : index
      %c0_32 = arith.constant 0 : index
      %358 = vector.load %arg9[%c0_31, %c0_32] : memref<8x1xf32, #tpu.memory_space<vmem>>, vector<8x1xf32>
      tpu.vector_store %arg9[%c0_31, %c0_32], %357 {strides = array<i32>} : memref<8x1xf32, #tpu.memory_space<vmem>>, vector<8x1xf32>,
      %cst_33 = arith.constant 0.000000e+00 : f32
      %359 = vector.broadcast %cst_33 : f32 to vector<8x128xf32>
      %c0_34 = arith.constant 0 : index
      %c0_35 = arith.constant 0 : index
      %360 = vector.load %arg10[%c0_34, %c0_35] : memref<8x128xf32, #tpu.memory_space<vmem>>, vector<8x128xf32>
      tpu.vector_store %arg10[%c0_34, %c0_35], %359 {strides = array<i32>} : memref<8x128xf32, #tpu.memory_space<vmem>>, vector<8x128xf32>,
    } else {
    }
    %c0 = arith.constant 0 : index
    %c0_1 = arith.constant 0 : index
    %c0_2 = arith.constant 0 : index
    %3 = vector.load %arg3[%c0, %c0_1, %c0_2] : memref<1x8x32xf32, #tpu.memory_space<vmem>>, vector<1x8x32xf32>
    %4 = vector.shape_cast %3 : vector<1x8x32xf32> to vector<8x32xf32>
    %c0_3 = arith.constant 0 : index
    %c0_4 = arith.constant 0 : index
    %c0_5 = arith.constant 0 : index
    %5 = vector.load %arg4[%c0_3, %c0_4, %c0_5] : memref<1x32x8xf32, #tpu.memory_space<vmem>>, vector<1x32x8xf32>
    %6 = vector.shape_cast %5 : vector<1x32x8xf32> to vector<32x8xf32>
    %cst = arith.constant 0.000000e+00 : f32
    %7 = vector.broadcast %cst : f32 to vector<8x8xf32>
    %8 = vector.extract_strided_slice %4 {offsets = [0, 0], sizes = [8, 1], strides = [1, 1]} : vector<8x32xf32> to vector<8x1xf32>
    %9 = vector.extract_strided_slice %6 {offsets = [0, 0], sizes = [1, 8], strides = [1, 1]} : vector<32x8xf32> to vector<1x8xf32>
    %10 = vector.broadcast %8 : vector<8x1xf32> to vector<8x8xf32>
    %11 = vector.broadcast %9 : vector<1x8xf32> to vector<8x8xf32>
    %12 = arith.addf %10, %11 : vector<8x8xf32>
    %13 = math.tanh %12 : vector<8x8xf32>
    %c0_6 = arith.constant 0 : index
    %14 = memref.load %arg6[%c0_6] : memref<32xf32, #tpu.memory_space<smem>>
    %15 = vector.broadcast %14 : f32 to vector<8x8xf32>
    %16 = arith.mulf %15, %13 : vector<8x8xf32>
    %17 = arith.addf %7, %16 : vector<8x8xf32>
    %18 = vector.extract_strided_slice %4 {offsets = [0, 1], sizes = [8, 1], strides = [1, 1]} : vector<8x32xf32> to vector<8x1xf32>
    %19 = vector.extract_strided_slice %6 {offsets = [1, 0], sizes = [1, 8], strides = [1, 1]} : vector<32x8xf32> to vector<1x8xf32>
    %20 = vector.broadcast %18 : vector<8x1xf32> to vector<8x8xf32>
    %21 = vector.broadcast %19 : vector<1x8xf32> to vector<8x8xf32>
    %22 = arith.addf %20, %21 : vector<8x8xf32>
    %23 = math.tanh %22 : vector<8x8xf32>
    %c1 = arith.constant 1 : index
    %24 = memref.load %arg6[%c1] : memref<32xf32, #tpu.memory_space<smem>>
    %25 = vector.broadcast %24 : f32 to vector<8x8xf32>
    %26 = arith.mulf %25, %23 : vector<8x8xf32>
    %27 = arith.addf %17, %26 : vector<8x8xf32>
    %28 = vector.extract_strided_slice %4 {offsets = [0, 2], sizes = [8, 1], strides = [1, 1]} : vector<8x32xf32> to vector<8x1xf32>
    %29 = vector.extract_strided_slice %6 {offsets = [2, 0], sizes = [1, 8], strides = [1, 1]} : vector<32x8xf32> to vector<1x8xf32>
    %30 = vector.broadcast %28 : vector<8x1xf32> to vector<8x8xf32>
    %31 = vector.broadcast %29 : vector<1x8xf32> to vector<8x8xf32>
    %32 = arith.addf %30, %31 : vector<8x8xf32>
    %33 = math.tanh %32 : vector<8x8xf32>
    %c2 = arith.constant 2 : index
    %34 = memref.load %arg6[%c2] : memref<32xf32, #tpu.memory_space<smem>>
    %35 = vector.broadcast %34 : f32 to vector<8x8xf32>
    %36 = arith.mulf %35, %33 : vector<8x8xf32>
    %37 = arith.addf %27, %36 : vector<8x8xf32>
    %38 = vector.extract_strided_slice %4 {offsets = [0, 3], sizes = [8, 1], strides = [1, 1]} : vector<8x32xf32> to vector<8x1xf32>
    %39 = vector.extract_strided_slice %6 {offsets = [3, 0], sizes = [1, 8], strides = [1, 1]} : vector<32x8xf32> to vector<1x8xf32>
    %40 = vector.broadcast %38 : vector<8x1xf32> to vector<8x8xf32>
    %41 = vector.broadcast %39 : vector<1x8xf32> to vector<8x8xf32>
    %42 = arith.addf %40, %41 : vector<8x8xf32>
    %43 = math.tanh %42 : vector<8x8xf32>
    %c3 = arith.constant 3 : index
    %44 = memref.load %arg6[%c3] : memref<32xf32, #tpu.memory_space<smem>>
    %45 = vector.broadcast %44 : f32 to vector<8x8xf32>
    %46 = arith.mulf %45, %43 : vector<8x8xf32>
    %47 = arith.addf %37, %46 : vector<8x8xf32>
    %48 = vector.extract_strided_slice %4 {offsets = [0, 4], sizes = [8, 1], strides = [1, 1]} : vector<8x32xf32> to vector<8x1xf32>
    %49 = vector.extract_strided_slice %6 {offsets = [4, 0], sizes = [1, 8], strides = [1, 1]} : vector<32x8xf32> to vector<1x8xf32>
    %50 = vector.broadcast %48 : vector<8x1xf32> to vector<8x8xf32>
    %51 = vector.broadcast %49 : vector<1x8xf32> to vector<8x8xf32>
    %52 = arith.addf %50, %51 : vector<8x8xf32>
    %53 = math.tanh %52 : vector<8x8xf32>
    %c4 = arith.constant 4 : index
    %54 = memref.load %arg6[%c4] : memref<32xf32, #tpu.memory_space<smem>>
    %55 = vector.broadcast %54 : f32 to vector<8x8xf32>
    %56 = arith.mulf %55, %53 : vector<8x8xf32>
    %57 = arith.addf %47, %56 : vector<8x8xf32>
    %58 = vector.extract_strided_slice %4 {offsets = [0, 5], sizes = [8, 1], strides = [1, 1]} : vector<8x32xf32> to vector<8x1xf32>
    %59 = vector.extract_strided_slice %6 {offsets = [5, 0], sizes = [1, 8], strides = [1, 1]} : vector<32x8xf32> to vector<1x8xf32>
    %60 = vector.broadcast %58 : vector<8x1xf32> to vector<8x8xf32>
    %61 = vector.broadcast %59 : vector<1x8xf32> to vector<8x8xf32>
    %62 = arith.addf %60, %61 : vector<8x8xf32>
    %63 = math.tanh %62 : vector<8x8xf32>
    %c5 = arith.constant 5 : index
    %64 = memref.load %arg6[%c5] : memref<32xf32, #tpu.memory_space<smem>>
    %65 = vector.broadcast %64 : f32 to vector<8x8xf32>
    %66 = arith.mulf %65, %63 : vector<8x8xf32>
    %67 = arith.addf %57, %66 : vector<8x8xf32>
    %68 = vector.extract_strided_slice %4 {offsets = [0, 6], sizes = [8, 1], strides = [1, 1]} : vector<8x32xf32> to vector<8x1xf32>
    %69 = vector.extract_strided_slice %6 {offsets = [6, 0], sizes = [1, 8], strides = [1, 1]} : vector<32x8xf32> to vector<1x8xf32>
    %70 = vector.broadcast %68 : vector<8x1xf32> to vector<8x8xf32>
    %71 = vector.broadcast %69 : vector<1x8xf32> to vector<8x8xf32>
    %72 = arith.addf %70, %71 : vector<8x8xf32>
    %73 = math.tanh %72 : vector<8x8xf32>
    %c6 = arith.constant 6 : index
    %74 = memref.load %arg6[%c6] : memref<32xf32, #tpu.memory_space<smem>>
    %75 = vector.broadcast %74 : f32 to vector<8x8xf32>
    %76 = arith.mulf %75, %73 : vector<8x8xf32>
    %77 = arith.addf %67, %76 : vector<8x8xf32>
    %78 = vector.extract_strided_slice %4 {offsets = [0, 7], sizes = [8, 1], strides = [1, 1]} : vector<8x32xf32> to vector<8x1xf32>
    %79 = vector.extract_strided_slice %6 {offsets = [7, 0], sizes = [1, 8], strides = [1, 1]} : vector<32x8xf32> to vector<1x8xf32>
    %80 = vector.broadcast %78 : vector<8x1xf32> to vector<8x8xf32>
    %81 = vector.broadcast %79 : vector<1x8xf32> to vector<8x8xf32>
    %82 = arith.addf %80, %81 : vector<8x8xf32>
    %83 = math.tanh %82 : vector<8x8xf32>
    %c7 = arith.constant 7 : index
    %84 = memref.load %arg6[%c7] : memref<32xf32, #tpu.memory_space<smem>>
    %85 = vector.broadcast %84 : f32 to vector<8x8xf32>
    %86 = arith.mulf %85, %83 : vector<8x8xf32>
    %87 = arith.addf %77, %86 : vector<8x8xf32>
    %88 = vector.extract_strided_slice %4 {offsets = [0, 8], sizes = [8, 1], strides = [1, 1]} : vector<8x32xf32> to vector<8x1xf32>
    %89 = vector.extract_strided_slice %6 {offsets = [8, 0], sizes = [1, 8], strides = [1, 1]} : vector<32x8xf32> to vector<1x8xf32>
    %90 = vector.broadcast %88 : vector<8x1xf32> to vector<8x8xf32>
    %91 = vector.broadcast %89 : vector<1x8xf32> to vector<8x8xf32>
    %92 = arith.addf %90, %91 : vector<8x8xf32>
    %93 = math.tanh %92 : vector<8x8xf32>
    %c8 = arith.constant 8 : index
    %94 = memref.load %arg6[%c8] : memref<32xf32, #tpu.memory_space<smem>>
    %95 = vector.broadcast %94 : f32 to vector<8x8xf32>
    %96 = arith.mulf %95, %93 : vector<8x8xf32>
    %97 = arith.addf %87, %96 : vector<8x8xf32>
    %98 = vector.extract_strided_slice %4 {offsets = [0, 9], sizes = [8, 1], strides = [1, 1]} : vector<8x32xf32> to vector<8x1xf32>
    %99 = vector.extract_strided_slice %6 {offsets = [9, 0], sizes = [1, 8], strides = [1, 1]} : vector<32x8xf32> to vector<1x8xf32>
    %100 = vector.broadcast %98 : vector<8x1xf32> to vector<8x8xf32>
    %101 = vector.broadcast %99 : vector<1x8xf32> to vector<8x8xf32>
    %102 = arith.addf %100, %101 : vector<8x8xf32>
    %103 = math.tanh %102 : vector<8x8xf32>
    %c9 = arith.constant 9 : index
    %104 = memref.load %arg6[%c9] : memref<32xf32, #tpu.memory_space<smem>>
    %105 = vector.broadcast %104 : f32 to vector<8x8xf32>
    %106 = arith.mulf %105, %103 : vector<8x8xf32>
    %107 = arith.addf %97, %106 : vector<8x8xf32>
    %108 = vector.extract_strided_slice %4 {offsets = [0, 10], sizes = [8, 1], strides = [1, 1]} : vector<8x32xf32> to vector<8x1xf32>
    %109 = vector.extract_strided_slice %6 {offsets = [10, 0], sizes = [1, 8], strides = [1, 1]} : vector<32x8xf32> to vector<1x8xf32>
    %110 = vector.broadcast %108 : vector<8x1xf32> to vector<8x8xf32>
    %111 = vector.broadcast %109 : vector<1x8xf32> to vector<8x8xf32>
    %112 = arith.addf %110, %111 : vector<8x8xf32>
    %113 = math.tanh %112 : vector<8x8xf32>
    %c10 = arith.constant 10 : index
    %114 = memref.load %arg6[%c10] : memref<32xf32, #tpu.memory_space<smem>>
    %115 = vector.broadcast %114 : f32 to vector<8x8xf32>
    %116 = arith.mulf %115, %113 : vector<8x8xf32>
    %117 = arith.addf %107, %116 : vector<8x8xf32>
    %118 = vector.extract_strided_slice %4 {offsets = [0, 11], sizes = [8, 1], strides = [1, 1]} : vector<8x32xf32> to vector<8x1xf32>
    %119 = vector.extract_strided_slice %6 {offsets = [11, 0], sizes = [1, 8], strides = [1, 1]} : vector<32x8xf32> to vector<1x8xf32>
    %120 = vector.broadcast %118 : vector<8x1xf32> to vector<8x8xf32>
    %121 = vector.broadcast %119 : vector<1x8xf32> to vector<8x8xf32>
    %122 = arith.addf %120, %121 : vector<8x8xf32>
    %123 = math.tanh %122 : vector<8x8xf32>
    %c11 = arith.constant 11 : index
    %124 = memref.load %arg6[%c11] : memref<32xf32, #tpu.memory_space<smem>>
    %125 = vector.broadcast %124 : f32 to vector<8x8xf32>
    %126 = arith.mulf %125, %123 : vector<8x8xf32>
    %127 = arith.addf %117, %126 : vector<8x8xf32>
    %128 = vector.extract_strided_slice %4 {offsets = [0, 12], sizes = [8, 1], strides = [1, 1]} : vector<8x32xf32> to vector<8x1xf32>
    %129 = vector.extract_strided_slice %6 {offsets = [12, 0], sizes = [1, 8], strides = [1, 1]} : vector<32x8xf32> to vector<1x8xf32>
    %130 = vector.broadcast %128 : vector<8x1xf32> to vector<8x8xf32>
    %131 = vector.broadcast %129 : vector<1x8xf32> to vector<8x8xf32>
    %132 = arith.addf %130, %131 : vector<8x8xf32>
    %133 = math.tanh %132 : vector<8x8xf32>
    %c12 = arith.constant 12 : index
    %134 = memref.load %arg6[%c12] : memref<32xf32, #tpu.memory_space<smem>>
    %135 = vector.broadcast %134 : f32 to vector<8x8xf32>
    %136 = arith.mulf %135, %133 : vector<8x8xf32>
    %137 = arith.addf %127, %136 : vector<8x8xf32>
    %138 = vector.extract_strided_slice %4 {offsets = [0, 13], sizes = [8, 1], strides = [1, 1]} : vector<8x32xf32> to vector<8x1xf32>
    %139 = vector.extract_strided_slice %6 {offsets = [13, 0], sizes = [1, 8], strides = [1, 1]} : vector<32x8xf32> to vector<1x8xf32>
    %140 = vector.broadcast %138 : vector<8x1xf32> to vector<8x8xf32>
    %141 = vector.broadcast %139 : vector<1x8xf32> to vector<8x8xf32>
    %142 = arith.addf %140, %141 : vector<8x8xf32>
    %143 = math.tanh %142 : vector<8x8xf32>
    %c13 = arith.constant 13 : index
    %144 = memref.load %arg6[%c13] : memref<32xf32, #tpu.memory_space<smem>>
    %145 = vector.broadcast %144 : f32 to vector<8x8xf32>
    %146 = arith.mulf %145, %143 : vector<8x8xf32>
    %147 = arith.addf %137, %146 : vector<8x8xf32>
    %148 = vector.extract_strided_slice %4 {offsets = [0, 14], sizes = [8, 1], strides = [1, 1]} : vector<8x32xf32> to vector<8x1xf32>
    %149 = vector.extract_strided_slice %6 {offsets = [14, 0], sizes = [1, 8], strides = [1, 1]} : vector<32x8xf32> to vector<1x8xf32>
    %150 = vector.broadcast %148 : vector<8x1xf32> to vector<8x8xf32>
    %151 = vector.broadcast %149 : vector<1x8xf32> to vector<8x8xf32>
    %152 = arith.addf %150, %151 : vector<8x8xf32>
    %153 = math.tanh %152 : vector<8x8xf32>
    %c14 = arith.constant 14 : index
    %154 = memref.load %arg6[%c14] : memref<32xf32, #tpu.memory_space<smem>>
    %155 = vector.broadcast %154 : f32 to vector<8x8xf32>
    %156 = arith.mulf %155, %153 : vector<8x8xf32>
    %157 = arith.addf %147, %156 : vector<8x8xf32>
    %158 = vector.extract_strided_slice %4 {offsets = [0, 15], sizes = [8, 1], strides = [1, 1]} : vector<8x32xf32> to vector<8x1xf32>
    %159 = vector.extract_strided_slice %6 {offsets = [15, 0], sizes = [1, 8], strides = [1, 1]} : vector<32x8xf32> to vector<1x8xf32>
    %160 = vector.broadcast %158 : vector<8x1xf32> to vector<8x8xf32>
    %161 = vector.broadcast %159 : vector<1x8xf32> to vector<8x8xf32>
    %162 = arith.addf %160, %161 : vector<8x8xf32>
    %163 = math.tanh %162 : vector<8x8xf32>
    %c15 = arith.constant 15 : index
    %164 = memref.load %arg6[%c15] : memref<32xf32, #tpu.memory_space<smem>>
    %165 = vector.broadcast %164 : f32 to vector<8x8xf32>
    %166 = arith.mulf %165, %163 : vector<8x8xf32>
    %167 = arith.addf %157, %166 : vector<8x8xf32>
    %168 = vector.extract_strided_slice %4 {offsets = [0, 16], sizes = [8, 1], strides = [1, 1]} : vector<8x32xf32> to vector<8x1xf32>
    %169 = vector.extract_strided_slice %6 {offsets = [16, 0], sizes = [1, 8], strides = [1, 1]} : vector<32x8xf32> to vector<1x8xf32>
    %170 = vector.broadcast %168 : vector<8x1xf32> to vector<8x8xf32>
    %171 = vector.broadcast %169 : vector<1x8xf32> to vector<8x8xf32>
    %172 = arith.addf %170, %171 : vector<8x8xf32>
    %173 = math.tanh %172 : vector<8x8xf32>
    %c16 = arith.constant 16 : index
    %174 = memref.load %arg6[%c16] : memref<32xf32, #tpu.memory_space<smem>>
    %175 = vector.broadcast %174 : f32 to vector<8x8xf32>
    %176 = arith.mulf %175, %173 : vector<8x8xf32>
    %177 = arith.addf %167, %176 : vector<8x8xf32>
    %178 = vector.extract_strided_slice %4 {offsets = [0, 17], sizes = [8, 1], strides = [1, 1]} : vector<8x32xf32> to vector<8x1xf32>
    %179 = vector.extract_strided_slice %6 {offsets = [17, 0], sizes = [1, 8], strides = [1, 1]} : vector<32x8xf32> to vector<1x8xf32>
    %180 = vector.broadcast %178 : vector<8x1xf32> to vector<8x8xf32>
    %181 = vector.broadcast %179 : vector<1x8xf32> to vector<8x8xf32>
    %182 = arith.addf %180, %181 : vector<8x8xf32>
    %183 = math.tanh %182 : vector<8x8xf32>
    %c17 = arith.constant 17 : index
    %184 = memref.load %arg6[%c17] : memref<32xf32, #tpu.memory_space<smem>>
    %185 = vector.broadcast %184 : f32 to vector<8x8xf32>
    %186 = arith.mulf %185, %183 : vector<8x8xf32>
    %187 = arith.addf %177, %186 : vector<8x8xf32>
    %188 = vector.extract_strided_slice %4 {offsets = [0, 18], sizes = [8, 1], strides = [1, 1]} : vector<8x32xf32> to vector<8x1xf32>
    %189 = vector.extract_strided_slice %6 {offsets = [18, 0], sizes = [1, 8], strides = [1, 1]} : vector<32x8xf32> to vector<1x8xf32>
    %190 = vector.broadcast %188 : vector<8x1xf32> to vector<8x8xf32>
    %191 = vector.broadcast %189 : vector<1x8xf32> to vector<8x8xf32>
    %192 = arith.addf %190, %191 : vector<8x8xf32>
    %193 = math.tanh %192 : vector<8x8xf32>
    %c18 = arith.constant 18 : index
    %194 = memref.load %arg6[%c18] : memref<32xf32, #tpu.memory_space<smem>>
    %195 = vector.broadcast %194 : f32 to vector<8x8xf32>
    %196 = arith.mulf %195, %193 : vector<8x8xf32>
    %197 = arith.addf %187, %196 : vector<8x8xf32>
    %198 = vector.extract_strided_slice %4 {offsets = [0, 19], sizes = [8, 1], strides = [1, 1]} : vector<8x32xf32> to vector<8x1xf32>
    %199 = vector.extract_strided_slice %6 {offsets = [19, 0], sizes = [1, 8], strides = [1, 1]} : vector<32x8xf32> to vector<1x8xf32>
    %200 = vector.broadcast %198 : vector<8x1xf32> to vector<8x8xf32>
    %201 = vector.broadcast %199 : vector<1x8xf32> to vector<8x8xf32>
    %202 = arith.addf %200, %201 : vector<8x8xf32>
    %203 = math.tanh %202 : vector<8x8xf32>
    %c19 = arith.constant 19 : index
    %204 = memref.load %arg6[%c19] : memref<32xf32, #tpu.memory_space<smem>>
    %205 = vector.broadcast %204 : f32 to vector<8x8xf32>
    %206 = arith.mulf %205, %203 : vector<8x8xf32>
    %207 = arith.addf %197, %206 : vector<8x8xf32>
    %208 = vector.extract_strided_slice %4 {offsets = [0, 20], sizes = [8, 1], strides = [1, 1]} : vector<8x32xf32> to vector<8x1xf32>
    %209 = vector.extract_strided_slice %6 {offsets = [20, 0], sizes = [1, 8], strides = [1, 1]} : vector<32x8xf32> to vector<1x8xf32>
    %210 = vector.broadcast %208 : vector<8x1xf32> to vector<8x8xf32>
    %211 = vector.broadcast %209 : vector<1x8xf32> to vector<8x8xf32>
    %212 = arith.addf %210, %211 : vector<8x8xf32>
    %213 = math.tanh %212 : vector<8x8xf32>
    %c20 = arith.constant 20 : index
    %214 = memref.load %arg6[%c20] : memref<32xf32, #tpu.memory_space<smem>>
    %215 = vector.broadcast %214 : f32 to vector<8x8xf32>
    %216 = arith.mulf %215, %213 : vector<8x8xf32>
    %217 = arith.addf %207, %216 : vector<8x8xf32>
    %218 = vector.extract_strided_slice %4 {offsets = [0, 21], sizes = [8, 1], strides = [1, 1]} : vector<8x32xf32> to vector<8x1xf32>
    %219 = vector.extract_strided_slice %6 {offsets = [21, 0], sizes = [1, 8], strides = [1, 1]} : vector<32x8xf32> to vector<1x8xf32>
    %220 = vector.broadcast %218 : vector<8x1xf32> to vector<8x8xf32>
    %221 = vector.broadcast %219 : vector<1x8xf32> to vector<8x8xf32>
    %222 = arith.addf %220, %221 : vector<8x8xf32>
    %223 = math.tanh %222 : vector<8x8xf32>
    %c21 = arith.constant 21 : index
    %224 = memref.load %arg6[%c21] : memref<32xf32, #tpu.memory_space<smem>>
    %225 = vector.broadcast %224 : f32 to vector<8x8xf32>
    %226 = arith.mulf %225, %223 : vector<8x8xf32>
    %227 = arith.addf %217, %226 : vector<8x8xf32>
    %228 = vector.extract_strided_slice %4 {offsets = [0, 22], sizes = [8, 1], strides = [1, 1]} : vector<8x32xf32> to vector<8x1xf32>
    %229 = vector.extract_strided_slice %6 {offsets = [22, 0], sizes = [1, 8], strides = [1, 1]} : vector<32x8xf32> to vector<1x8xf32>
    %230 = vector.broadcast %228 : vector<8x1xf32> to vector<8x8xf32>
    %231 = vector.broadcast %229 : vector<1x8xf32> to vector<8x8xf32>
    %232 = arith.addf %230, %231 : vector<8x8xf32>
    %233 = math.tanh %232 : vector<8x8xf32>
    %c22 = arith.constant 22 : index
    %234 = memref.load %arg6[%c22] : memref<32xf32, #tpu.memory_space<smem>>
    %235 = vector.broadcast %234 : f32 to vector<8x8xf32>
    %236 = arith.mulf %235, %233 : vector<8x8xf32>
    %237 = arith.addf %227, %236 : vector<8x8xf32>
    %238 = vector.extract_strided_slice %4 {offsets = [0, 23], sizes = [8, 1], strides = [1, 1]} : vector<8x32xf32> to vector<8x1xf32>
    %239 = vector.extract_strided_slice %6 {offsets = [23, 0], sizes = [1, 8], strides = [1, 1]} : vector<32x8xf32> to vector<1x8xf32>
    %240 = vector.broadcast %238 : vector<8x1xf32> to vector<8x8xf32>
    %241 = vector.broadcast %239 : vector<1x8xf32> to vector<8x8xf32>
    %242 = arith.addf %240, %241 : vector<8x8xf32>
    %243 = math.tanh %242 : vector<8x8xf32>
    %c23 = arith.constant 23 : index
    %244 = memref.load %arg6[%c23] : memref<32xf32, #tpu.memory_space<smem>>
    %245 = vector.broadcast %244 : f32 to vector<8x8xf32>
    %246 = arith.mulf %245, %243 : vector<8x8xf32>
    %247 = arith.addf %237, %246 : vector<8x8xf32>
    %248 = vector.extract_strided_slice %4 {offsets = [0, 24], sizes = [8, 1], strides = [1, 1]} : vector<8x32xf32> to vector<8x1xf32>
    %249 = vector.extract_strided_slice %6 {offsets = [24, 0], sizes = [1, 8], strides = [1, 1]} : vector<32x8xf32> to vector<1x8xf32>
    %250 = vector.broadcast %248 : vector<8x1xf32> to vector<8x8xf32>
    %251 = vector.broadcast %249 : vector<1x8xf32> to vector<8x8xf32>
    %252 = arith.addf %250, %251 : vector<8x8xf32>
    %253 = math.tanh %252 : vector<8x8xf32>
    %c24 = arith.constant 24 : index
    %254 = memref.load %arg6[%c24] : memref<32xf32, #tpu.memory_space<smem>>
    %255 = vector.broadcast %254 : f32 to vector<8x8xf32>
    %256 = arith.mulf %255, %253 : vector<8x8xf32>
    %257 = arith.addf %247, %256 : vector<8x8xf32>
    %258 = vector.extract_strided_slice %4 {offsets = [0, 25], sizes = [8, 1], strides = [1, 1]} : vector<8x32xf32> to vector<8x1xf32>
    %259 = vector.extract_strided_slice %6 {offsets = [25, 0], sizes = [1, 8], strides = [1, 1]} : vector<32x8xf32> to vector<1x8xf32>
    %260 = vector.broadcast %258 : vector<8x1xf32> to vector<8x8xf32>
    %261 = vector.broadcast %259 : vector<1x8xf32> to vector<8x8xf32>
    %262 = arith.addf %260, %261 : vector<8x8xf32>
    %263 = math.tanh %262 : vector<8x8xf32>
    %c25 = arith.constant 25 : index
    %264 = memref.load %arg6[%c25] : memref<32xf32, #tpu.memory_space<smem>>
    %265 = vector.broadcast %264 : f32 to vector<8x8xf32>
    %266 = arith.mulf %265, %263 : vector<8x8xf32>
    %267 = arith.addf %257, %266 : vector<8x8xf32>
    %268 = vector.extract_strided_slice %4 {offsets = [0, 26], sizes = [8, 1], strides = [1, 1]} : vector<8x32xf32> to vector<8x1xf32>
    %269 = vector.extract_strided_slice %6 {offsets = [26, 0], sizes = [1, 8], strides = [1, 1]} : vector<32x8xf32> to vector<1x8xf32>
    %270 = vector.broadcast %268 : vector<8x1xf32> to vector<8x8xf32>
    %271 = vector.broadcast %269 : vector<1x8xf32> to vector<8x8xf32>
    %272 = arith.addf %270, %271 : vector<8x8xf32>
    %273 = math.tanh %272 : vector<8x8xf32>
    %c26 = arith.constant 26 : index
    %274 = memref.load %arg6[%c26] : memref<32xf32, #tpu.memory_space<smem>>
    %275 = vector.broadcast %274 : f32 to vector<8x8xf32>
    %276 = arith.mulf %275, %273 : vector<8x8xf32>
    %277 = arith.addf %267, %276 : vector<8x8xf32>
    %278 = vector.extract_strided_slice %4 {offsets = [0, 27], sizes = [8, 1], strides = [1, 1]} : vector<8x32xf32> to vector<8x1xf32>
    %279 = vector.extract_strided_slice %6 {offsets = [27, 0], sizes = [1, 8], strides = [1, 1]} : vector<32x8xf32> to vector<1x8xf32>
    %280 = vector.broadcast %278 : vector<8x1xf32> to vector<8x8xf32>
    %281 = vector.broadcast %279 : vector<1x8xf32> to vector<8x8xf32>
    %282 = arith.addf %280, %281 : vector<8x8xf32>
    %283 = math.tanh %282 : vector<8x8xf32>
    %c27 = arith.constant 27 : index
    %284 = memref.load %arg6[%c27] : memref<32xf32, #tpu.memory_space<smem>>
    %285 = vector.broadcast %284 : f32 to vector<8x8xf32>
    %286 = arith.mulf %285, %283 : vector<8x8xf32>
    %287 = arith.addf %277, %286 : vector<8x8xf32>
    %288 = vector.extract_strided_slice %4 {offsets = [0, 28], sizes = [8, 1], strides = [1, 1]} : vector<8x32xf32> to vector<8x1xf32>
    %289 = vector.extract_strided_slice %6 {offsets = [28, 0], sizes = [1, 8], strides = [1, 1]} : vector<32x8xf32> to vector<1x8xf32>
    %290 = vector.broadcast %288 : vector<8x1xf32> to vector<8x8xf32>
    %291 = vector.broadcast %289 : vector<1x8xf32> to vector<8x8xf32>
    %292 = arith.addf %290, %291 : vector<8x8xf32>
    %293 = math.tanh %292 : vector<8x8xf32>
    %c28 = arith.constant 28 : index
    %294 = memref.load %arg6[%c28] : memref<32xf32, #tpu.memory_space<smem>>
    %295 = vector.broadcast %294 : f32 to vector<8x8xf32>
    %296 = arith.mulf %295, %293 : vector<8x8xf32>
    %297 = arith.addf %287, %296 : vector<8x8xf32>
    %298 = vector.extract_strided_slice %4 {offsets = [0, 29], sizes = [8, 1], strides = [1, 1]} : vector<8x32xf32> to vector<8x1xf32>
    %299 = vector.extract_strided_slice %6 {offsets = [29, 0], sizes = [1, 8], strides = [1, 1]} : vector<32x8xf32> to vector<1x8xf32>
    %300 = vector.broadcast %298 : vector<8x1xf32> to vector<8x8xf32>
    %301 = vector.broadcast %299 : vector<1x8xf32> to vector<8x8xf32>
    %302 = arith.addf %300, %301 : vector<8x8xf32>
    %303 = math.tanh %302 : vector<8x8xf32>
    %c29 = arith.constant 29 : index
    %304 = memref.load %arg6[%c29] : memref<32xf32, #tpu.memory_space<smem>>
    %305 = vector.broadcast %304 : f32 to vector<8x8xf32>
    %306 = arith.mulf %305, %303 : vector<8x8xf32>
    %307 = arith.addf %297, %306 : vector<8x8xf32>
    %308 = vector.extract_strided_slice %4 {offsets = [0, 30], sizes = [8, 1], strides = [1, 1]} : vector<8x32xf32> to vector<8x1xf32>
    %309 = vector.extract_strided_slice %6 {offsets = [30, 0], sizes = [1, 8], strides = [1, 1]} : vector<32x8xf32> to vector<1x8xf32>
    %310 = vector.broadcast %308 : vector<8x1xf32> to vector<8x8xf32>
    %311 = vector.broadcast %309 : vector<1x8xf32> to vector<8x8xf32>
    %312 = arith.addf %310, %311 : vector<8x8xf32>
    %313 = math.tanh %312 : vector<8x8xf32>
    %c30 = arith.constant 30 : index
    %314 = memref.load %arg6[%c30] : memref<32xf32, #tpu.memory_space<smem>>
    %315 = vector.broadcast %314 : f32 to vector<8x8xf32>
    %316 = arith.mulf %315, %313 : vector<8x8xf32>
    %317 = arith.addf %307, %316 : vector<8x8xf32>
    %318 = vector.extract_strided_slice %4 {offsets = [0, 31], sizes = [8, 1], strides = [1, 1]} : vector<8x32xf32> to vector<8x1xf32>
    %319 = vector.extract_strided_slice %6 {offsets = [31, 0], sizes = [1, 8], strides = [1, 1]} : vector<32x8xf32> to vector<1x8xf32>
    %320 = vector.broadcast %318 : vector<8x1xf32> to vector<8x8xf32>
    %321 = vector.broadcast %319 : vector<1x8xf32> to vector<8x8xf32>
    %322 = arith.addf %320, %321 : vector<8x8xf32>
    %323 = math.tanh %322 : vector<8x8xf32>
    %c31 = arith.constant 31 : index
    %324 = memref.load %arg6[%c31] : memref<32xf32, #tpu.memory_space<smem>>
    %325 = vector.broadcast %324 : f32 to vector<8x8xf32>
    %326 = arith.mulf %325, %323 : vector<8x8xf32>
    %327 = arith.addf %317, %326 : vector<8x8xf32>
    %c0_7 = arith.constant 0 : index
    %c0_8 = arith.constant 0 : index
    %328 = vector.load %arg8[%c0_7, %c0_8] : memref<8x1xf32, #tpu.memory_space<vmem>>, vector<8x1xf32>
    %cst_9 = arith.constant dense<0xFF800000> : vector<8xf32>
    %329 = vector.multi_reduction <maximumf>, %327, %cst_9 [1] : vector<8x8xf32> to vector<8xf32>
    %330 = vector.shape_cast %329 : vector<8xf32> to vector<8x1xf32>
    %331 = arith.maximumf %328, %330 : vector<8x1xf32>
    %332 = arith.subf %328, %331 : vector<8x1xf32>
    %333 = math.exp %332 : vector<8x1xf32>
    %334 = vector.broadcast %331 : vector<8x1xf32> to vector<8x8xf32>
    %335 = arith.subf %327, %334 : vector<8x8xf32>
    %336 = math.exp %335 : vector<8x8xf32>
    %c0_10 = arith.constant 0 : index
    %c0_11 = arith.constant 0 : index
    %337 = vector.load %arg9[%c0_10, %c0_11] : memref<8x1xf32, #tpu.memory_space<vmem>>, vector<8x1xf32>
    %338 = arith.mulf %333, %337 : vector<8x1xf32>
    %cst_12 = arith.constant dense<0.000000e+00> : vector<8xf32>
    %339 = vector.multi_reduction <add>, %336, %cst_12 [1] : vector<8x8xf32> to vector<8xf32>
    %340 = vector.shape_cast %339 : vector<8xf32> to vector<8x1xf32>
    %341 = arith.addf %338, %340 : vector<8x1xf32>
    %c0_13 = arith.constant 0 : index
    %c0_14 = arith.constant 0 : index
    %342 = vector.load %arg9[%c0_13, %c0_14] : memref<8x1xf32, #tpu.memory_space<vmem>>, vector<8x1xf32>
    tpu.vector_store %arg9[%c0_13, %c0_14], %341 {strides = array<i32>} : memref<8x1xf32, #tpu.memory_space<vmem>>, vector<8x1xf32>,
    %c0_15 = arith.constant 0 : index
    %c0_16 = arith.constant 0 : index
    %c0_17 = arith.constant 0 : index
    %343 = vector.load %arg5[%c0_15, %c0_16, %c0_17] : memref<1x8x128xf32, #tpu.memory_space<vmem>>, vector<1x8x128xf32>
    %344 = vector.shape_cast %343 : vector<1x8x128xf32> to vector<8x128xf32>
    %c0_18 = arith.constant 0 : index
    %c0_19 = arith.constant 0 : index
    %345 = vector.load %arg10[%c0_18, %c0_19] : memref<8x128xf32, #tpu.memory_space<vmem>>, vector<8x128xf32>
    %346 = vector.broadcast %333 : vector<8x1xf32> to vector<8x128xf32>
    %347 = arith.mulf %346, %345 : vector<8x128xf32>
    %cst_20 = arith.constant dense<0.000000e+00> : vector<8x128xf32>
    %348 = tpu.matmul %336, %344, %cst_20 {dimension_numbers = #tpu.dot_dimension_numbers<[1], [0], [0], [1], [0, 0, 1, 1], [], []>} : vector<8x8xf32>, vector<8x128xf32>, vector<8x128xf32> -> vector<8x128xf32>
    %349 = arith.addf %347, %348 : vector<8x128xf32>
    %c0_21 = arith.constant 0 : index
    %c0_22 = arith.constant 0 : index
    %350 = vector.load %arg10[%c0_21, %c0_22] : memref<8x128xf32, #tpu.memory_space<vmem>>, vector<8x128xf32>
    tpu.vector_store %arg10[%c0_21, %c0_22], %349 {strides = array<i32>} : memref<8x128xf32, #tpu.memory_space<vmem>>, vector<8x128xf32>,
    %c0_23 = arith.constant 0 : index
    %c0_24 = arith.constant 0 : index
    %351 = vector.load %arg8[%c0_23, %c0_24] : memref<8x1xf32, #tpu.memory_space<vmem>>, vector<8x1xf32>
    tpu.vector_store %arg8[%c0_23, %c0_24], %331 {strides = array<i32>} : memref<8x1xf32, #tpu.memory_space<vmem>>, vector<8x1xf32>,
    %c0_i32_25 = arith.constant 0 : i32
    %352 = arith.cmpi eq, %arg2, %c0_i32_25 : i32
    %353 = arith.extui %352 : i1 to i32
    %c0_i32_26 = arith.constant 0 : i32
    %354 = arith.cmpi ne, %353, %c0_i32_26 : i32
    scf.if %354 {
      %c0_27 = arith.constant 0 : index
      %c0_28 = arith.constant 0 : index
      %355 = vector.load %arg9[%c0_27, %c0_28] : memref<8x1xf32, #tpu.memory_space<vmem>>, vector<8x1xf32>
      %356 = tpu.reciprocal %355 : vector<8x1xf32> -> vector<8x1xf32>
      %c0_29 = arith.constant 0 : index
      %c0_30 = arith.constant 0 : index
      %357 = vector.load %arg10[%c0_29, %c0_30] : memref<8x128xf32, #tpu.memory_space<vmem>>, vector<8x128xf32>
      %358 = vector.broadcast %356 : vector<8x1xf32> to vector<8x128xf32>
      %359 = arith.mulf %357, %358 : vector<8x128xf32>
      %c0_31 = arith.constant 0 : index
      %c0_32 = arith.constant 0 : index
      %c0_33 = arith.constant 0 : index
      %360 = vector.load %arg7[%c0_31, %c0_32, %c0_33] : memref<1x8x128xf32, #tpu.memory_space<vmem>>, vector<1x8x128xf32>
      %361 = vector.shape_cast %360 : vector<1x8x128xf32> to vector<8x128xf32>
      %362 = vector.shape_cast %359 : vector<8x128xf32> to vector<1x8x128xf32>
      tpu.vector_store %arg7[%c0_31, %c0_32, %c0_33], %362 {strides = array<i32>} : memref<1x8x128xf32, #tpu.memory_space<vmem>>, vector<1x8x128xf32>,
    } else {
    }
    return
  }
  func.func @transform_0(%arg0: i32, %arg1: i32, %arg2: i32) -> (i32, i32, i32) {
    %c0_i32 = arith.constant 0 : i32
    %c0_i32_0 = arith.constant 0 : i32
    return %arg0, %arg1, %c0_i32 : i32, i32, i32
  }
  func.func @transform_1(%arg0: i32, %arg1: i32, %arg2: i32) -> (i32, i32, i32) {
    %c0_i32 = arith.constant 0 : i32
    %c0_i32_0 = arith.constant 0 : i32
    return %arg0, %c0_i32, %arg2 : i32, i32, i32
  }
  func.func @transform_2(%arg0: i32, %arg1: i32, %arg2: i32) -> (i32, i32, i32) {
    %c0_i32 = arith.constant 0 : i32
    %c0_i32_0 = arith.constant 0 : i32
    return %arg0, %arg2, %c0_i32 : i32, i32, i32
  }
  func.func @transform_3(%arg0: i32, %arg1: i32, %arg2: i32) -> i32 {
    %c0_i32 = arith.constant 0 : i32
    %c0_i32_0 = arith.constant 0 : i32
    return %c0_i32 : i32
  }
  func.func @transform_4(%arg0: i32, %arg1: i32, %arg2: i32) -> (i32, i32, i32) {
    %c0_i32 = arith.constant 0 : i32
    %c0_i32_0 = arith.constant 0 : i32
    return %arg0, %arg1, %c0_i32 : i32, i32, i32
  }
}

</mosaic_0001>

<llo_original>
// kernel: tpu_custom_call.1
$region0: #{tpu_custom_call.1}
  #allocation0 [shape = 'u32[]', space=smem, size = 0x4, offset = 0x4, fixed_abs, tag = 'smem constant byte address 0x4 - core index']
  #allocation1 [shape = 'u32[144,128]{1,0:T(1,128)}', space=vmem, size = 0x12000, scoped, tag = 'internal scratch']
  #allocation2 [shape = 'f32[8,1]{1,0:T(8,128)}', space=vmem, size = 0x1000, scoped, tag = 'scratch operand']
  #allocation3 [shape = 'f32[8,1]{1,0:T(8,128)}', space=vmem, size = 0x1000, scoped, tag = 'scratch operand']
  #allocation4 [shape = 'f32[8,128]{1,0:T(8,128)}', space=vmem, size = 0x1000, scoped, tag = 'scratch operand']
  %s0 = inlined_call_operand.vmem [shape: f32[2,8,32], index: 0, kind: input, shape index: {}]
  %s1 = inlined_call_operand.vmem [shape: f32[2,32,8], index: 1, kind: input, shape index: {}]
  %s2 = inlined_call_operand.vmem [shape: f32[2,8,128], index: 2, kind: input, shape index: {}]
  %s3 = inlined_call_operand.vmem [shape: f32[32], index: 3, kind: input, shape index: {}]
  %s4 = inlined_call_operand.hbm [shape: f32[2,8,128], index: 4, kind: output, shape index: {}]
  %s5 = sld [smem:[#allocation0]]
  $region61: #{tpu_custom_call.1} parent=0
    _
  %s7 = ssub.s32 1, %s5
  %s8 = scalar_select 0, %s7, %s5
  $region1: #{tpu_custom_call.1} parent=0
    #allocation5 [shape = 'u8[512]{0}', space=smem, size = 0x200, scoped, tag = 'input window, operand 3, single buffered']
    #allocation6 [shape = 's32[2]{0}', space=sflag, size = 0x8, scoped, tag = 'scoped memory for tpu_custom_call.1']
    #allocation7 [shape = 's32[2]{0}', space=sflag, size = 0x8, scoped, tag = 'scoped memory for tpu_custom_call.1']
    #allocation8 [shape = 'u8[8192]{0}', space=vmem, size = 0x2000, scoped, tag = 'output window, operand 0']
    %9 = vsyncpa [#allocation7], 0
    %10 = vsyncpa [#allocation6], 0
    %s11 = scalar_lea.sflag [#allocation6], 1
    %12 = vsyncpa %s11, 0
    loop: start=0, step=1, limit=4
    $region2: #{tpu_custom_call.1} parent=1 // loop_pre_header
      _
    $region3: #{tpu_custom_call.1} parent=1 // loop_header
      %s14 = sphi 0, %s18
      %p15 = scmp.ge.s32.totalorder %s14, 4
      %s21 = sphi 0, %s40
      %s22 = sphi 0, %s36
      %s23 = sphi 0, %s32
      %s24 = sphi 0, %s21
      %s25 = sphi 0, %s22
      %s26 = sphi 0, %s23
      %s27 = sphi 0, %s24
      %s28 = sphi 0, %s25
      %s29 = sphi 0, %s26
      %s45 = sphi 0, %s47
      %s48 = sphi 0, %s45
      %s49 = sphi 0, %s48
      %s65 = sphi 0, %s49
      %s73 = sphi 0, %s75
      %s76 = sphi 0, %s73
      %s77 = sphi 0, %s76
      %s93 = sphi 0, %s77
      %s101 = sphi 0, %s103
      %s104 = sphi 0, %s101
      %s105 = sphi 0, %s104
      %s121 = sphi 0, %s105
      %s125 = sphi 0, %s125
      %s127 = sphi 0, %s125
      %s128 = sphi 0, %s127
      %s142 = sphi 0, %s128
      %s150 = sphi 0, %s152
      %s153 = sphi 0, %s150
      %s154 = sphi 0, %s153
      %s170 = sphi 0, %s154
    $region4: #{tpu_custom_call.1} parent=1 // loop_header_branch
      %17 = sbr.rel (%p15) target = $region8
    $region5: #{tpu_custom_call.1} parent=1 // loop_body
      %s19 = ssub.s32 %s14, 1
      %s20 = ssub.s32 %s14, 2
      %s30 = sadd.s32 1, %s23
      %p31 = scmp.ge.s32.totalorder %s30, 1
      %s32 = scalar_select %p31, 0, %s30
      %s33 = sadd.s32 1, %s22
      %s34 = scalar_select %p31, %s33, %s22
      %p35 = scmp.ge.s32.totalorder %s34, 1
      %s36 = scalar_select %p35, 0, %s34
      %s37 = sadd.s32 1, %s21
      %s38 = scalar_select %p35, %s37, %s21
      %p39 = scmp.ge.s32.totalorder %s38, 2
      %s40 = scalar_select %p39, 0, %s38
      %s41 = ssub.s32 %s21, %s40
      %s42 = ssub.s32 %s22, %s36
      %s43 = sor.u32 %s41, %s42
      %p44 = scmp.eq.s32.totalorder %s43, 0
      %s46 = sadd.s32 %s45, 1
      %s47 = scalar_select %p44, %s45, %s46
      %p50 = pneg %p44
      %p51 = scmp.eq.s32.totalorder %s14, 1
      %p52 = por %p50, %p51
      %p53 = scmp.ne.s32.totalorder %s45, %s48
      %p54 = scmp.eq.s32.totalorder %s14, 0
      %p55 = por %p53, %p54
      %p56 = scmp.ne.s32.totalorder %s45, %s48
      %p57 = scmp.eq.s32.totalorder %s19, 1
      %p58 = por %p56, %p57
      %p59 = scmp.ne.s32.totalorder %s48, %s49
      %p60 = scmp.eq.s32.totalorder %s19, 0
      %p61 = por %p59, %p60
      %p62 = scmp.ne.s32.totalorder %s48, %s49
      %p63 = scmp.eq.s32.totalorder %s20, 1
      %p64 = por %p62, %p63
      %p66 = scmp.ne.s32.totalorder %s49, %s65
      %p67 = scmp.eq.s32.totalorder %s20, 0
      %p68 = por %p66, %p67
      %s69 = ssub.s32 %s21, %s40
      %s70 = ssub.s32 %s23, %s32
      %s71 = sor.u32 %s69, %s70
      %p72 = scmp.eq.s32.totalorder %s71, 0
      %s74 = sadd.s32 %s73, 1
      %s75 = scalar_select %p72, %s73, %s74
      %p78 = pneg %p72
      %p79 = scmp.eq.s32.totalorder %s14, 1
      %p80 = por %p78, %p79
      %p81 = scmp.ne.s32.totalorder %s73, %s76
      %p82 = scmp.eq.s32.totalorder %s14, 0
      %p83 = por %p81, %p82
      %p84 = scmp.ne.s32.totalorder %s73, %s76
      %p85 = scmp.eq.s32.totalorder %s19, 1
      %p86 = por %p84, %p85
      %p87 = scmp.ne.s32.totalorder %s76, %s77
      %p88 = scmp.eq.s32.totalorder %s19, 0
      %p89 = por %p87, %p88
      %p90 = scmp.ne.s32.totalorder %s76, %s77
      %p91 = scmp.eq.s32.totalorder %s20, 1
      %p92 = por %p90, %p91
      %p94 = scmp.ne.s32.totalorder %s77, %s93
      %p95 = scmp.eq.s32.totalorder %s20, 0
      %p96 = por %p94, %p95
      %s97 = ssub.s32 %s21, %s40
      %s98 = ssub.s32 %s23, %s32
      %s99 = sor.u32 %s97, %s98
      %p100 = scmp.eq.s32.totalorder %s99, 0
      %s102 = sadd.s32 %s101, 1
      %s103 = scalar_select %p100, %s101, %s102
      %p106 = pneg %p100
      %p107 = scmp.eq.s32.totalorder %s14, 1
      %p108 = por %p106, %p107
      %p109 = scmp.ne.s32.totalorder %s101, %s104
      %p110 = scmp.eq.s32.totalorder %s14, 0
      %p111 = por %p109, %p110
      %p112 = scmp.ne.s32.totalorder %s101, %s104
      %p113 = scmp.eq.s32.totalorder %s19, 1
      %p114 = por %p112, %p113
      %p115 = scmp.ne.s32.totalorder %s104, %s105
      %p116 = scmp.eq.s32.totalorder %s19, 0
      %p117 = por %p115, %p116
      %p118 = scmp.ne.s32.totalorder %s104, %s105
      %p119 = scmp.eq.s32.totalorder %s20, 1
      %p120 = por %p118, %p119
      %p122 = scmp.ne.s32.totalorder %s105, %s121
      %p123 = scmp.eq.s32.totalorder %s20, 0
      %p124 = por %p122, %p123
      %s126 = sadd.s32 %s125, 1
      %p129 = scmp.eq.s32.totalorder %s14, 1
      %p130 = scmp.ne.s32.totalorder %s125, %s127
      %p131 = scmp.eq.s32.totalorder %s14, 0
      %p132 = por %p130, %p131
      %p133 = scmp.ne.s32.totalorder %s125, %s127
      %p134 = scmp.eq.s32.totalorder %s19, 1
      %p135 = por %p133, %p134
      %p136 = scmp.ne.s32.totalorder %s127, %s128
      %p137 = scmp.eq.s32.totalorder %s19, 0
      %p138 = por %p136, %p137
      %p139 = scmp.ne.s32.totalorder %s127, %s128
      %p140 = scmp.eq.s32.totalorder %s20, 1
      %p141 = por %p139, %p140
      %p143 = scmp.ne.s32.totalorder %s128, %s142
      %p144 = scmp.eq.s32.totalorder %s20, 0
      %p145 = por %p143, %p144
      %s146 = ssub.s32 %s21, %s40
      %s147 = ssub.s32 %s22, %s36
      %s148 = sor.u32 %s146, %s147
      %p149 = scmp.eq.s32.totalorder %s148, 0
      %s151 = sadd.s32 %s150, 1
      %s152 = scalar_select %p149, %s150, %s151
      %p155 = pneg %p149
      %p156 = scmp.eq.s32.totalorder %s14, 1
      %p157 = por %p155, %p156
      %p158 = scmp.ne.s32.totalorder %s150, %s153
      %p159 = scmp.eq.s32.totalorder %s14, 0
      %p160 = por %p158, %p159
      %p161 = scmp.ne.s32.totalorder %s150, %s153
      %p162 = scmp.eq.s32.totalorder %s19, 1
      %p163 = por %p161, %p162
      %p164 = scmp.ne.s32.totalorder %s153, %s154
      %p165 = scmp.eq.s32.totalorder %s19, 0
      %p166 = por %p164, %p165
      %p167 = scmp.ne.s32.totalorder %s153, %s154
      %p168 = scmp.eq.s32.totalorder %s20, 1
      %p169 = por %p167, %p168
      %p171 = scmp.ne.s32.totalorder %s154, %s170
      %p172 = scmp.eq.s32.totalorder %s20, 0
      %p173 = por %p171, %p172
      %p174 = scmp.le.s32.totalorder 1, %s14
      %p175 = scmp.lt.s32.totalorder %s14, 3
      %p176 = pnand %p174, %p175
      %p177 = pneg %p176
      // Predicated region
      $region9: #{tpu_custom_call.1} parent=5 // pred_check
        _
      $region10: #{tpu_custom_call.1} parent=5 // pred_check_branch
        %179 = sbr.rel (%p176) target = $region12
      $region11: #{tpu_custom_call.1} parent=5 // pred_region
        %s180 = ssub.s32 %s14, 1
        // Predicated region
        $region13: #{tpu_custom_call.1} parent=11 // pred_check
          %p181 = pneg %p138
        $region14: #{tpu_custom_call.1} parent=11 // pred_check_branch
          %183 = sbr.rel (%p181) target = $region16
        $region15: #{tpu_custom_call.1} parent=11 // pred_region
          %s185 = ssub.s32 16, 16
          %186 = vsyncadd [#allocation7], %s185
          %s188 = sshll.u32 %s3, 4
          %s189 = int_to_ptr.vmem [resolvable:$true] %s188
          %191 = dma.vmem_to_smem %s189, 16, [#allocation5], [#allocation7]
        $region16: #{tpu_custom_call.1} parent=11 // pred_fallthru
          _
      $region12: #{tpu_custom_call.1} parent=5 // pred_fallthru
        _
      %p192 = scmp.lt.s32.totalorder %s14, 2
      // Predicated region
      $region17: #{tpu_custom_call.1} parent=5 // pred_check
        %p193 = pneg %p192
      $region18: #{tpu_custom_call.1} parent=5 // pred_check_branch
        %195 = sbr.rel (%p193) target = $region20
      $region19: #{tpu_custom_call.1} parent=5 // pred_region
        // Predicated region
        $region21: #{tpu_custom_call.1} parent=19 // pred_check
          %p196 = pneg %p55
        $region22: #{tpu_custom_call.1} parent=19 // pred_check_branch
          %198 = sbr.rel (%p196) target = $region24
        $region23: #{tpu_custom_call.1} parent=19 // pred_region
          %p199 = scmp.lt.s32.totalorder %s21, 1
          %s200 = scalar_select %p199, %s21, 1
          %p201 = scmp.lt.s32.totalorder %s22, 0
          %s202 = scalar_select %p201, %s22, 0
          %s203 = sadd.s32 %s202, %s200
          %s204 = smul.addr %s203, 8
          %s205 = scalar_lea.vmem %s0, %s204
        $region24: #{tpu_custom_call.1} parent=19 // pred_fallthru
          _
        // Predicated region
        $region25: #{tpu_custom_call.1} parent=19 // pred_check
          %p206 = pneg %p83
        $region26: #{tpu_custom_call.1} parent=19 // pred_check_branch
          %208 = sbr.rel (%p206) target = $region28
        $region27: #{tpu_custom_call.1} parent=19 // pred_region
          %p209 = scmp.lt.s32.totalorder %s21, 1
          %s210 = scalar_select %p209, %s21, 1
          %p211 = scmp.lt.s32.totalorder %s23, 0
          %s212 = scalar_select %p211, %s23, 0
          %s213 = smul.addr %s210, 4
          %s214 = sadd.s32 %s212, %s213
          %s215 = smul.addr %s214, 8
          %s216 = scalar_lea.vmem %s1, %s215
        $region28: #{tpu_custom_call.1} parent=19 // pred_fallthru
          _
        // Predicated region
        $region29: #{tpu_custom_call.1} parent=19 // pred_check
          %p217 = pneg %p111
        $region30: #{tpu_custom_call.1} parent=19 // pred_check_branch
          %219 = sbr.rel (%p217) target = $region32
        $region31: #{tpu_custom_call.1} parent=19 // pred_region
          %p220 = scmp.lt.s32.totalorder %s21, 1
          %s221 = scalar_select %p220, %s21, 1
          %p222 = scmp.lt.s32.totalorder %s23, 0
          %s223 = scalar_select %p222, %s23, 0
          %s224 = sadd.s32 %s223, %s221
          %s225 = smul.addr %s224, 8
          %s226 = scalar_lea.vmem %s2, %s225
        $region32: #{tpu_custom_call.1} parent=19 // pred_fallthru
          _
      $region20: #{tpu_custom_call.1} parent=5 // pred_fallthru
        _
      %p227 = scmp.le.s32.totalorder 1, %s14
      %p228 = scmp.lt.s32.totalorder %s14, 3
      %p229 = pnand %p227, %p228
      %p230 = pneg %p229
      // Predicated region
      $region33: #{tpu_custom_call.1} parent=5 // pred_check
        _
      $region34: #{tpu_custom_call.1} parent=5 // pred_check_branch
        %232 = sbr.rel (%p229) target = $region36
      $region35: #{tpu_custom_call.1} parent=5 // pred_region
        %s233 = ssub.s32 %s14, 1
        // Predicated region
        $region37: #{tpu_custom_call.1} parent=35 // pred_check
          %p234 = pneg %p138
        $region38: #{tpu_custom_call.1} parent=35 // pred_check_branch
          %236 = sbr.rel (%p234) target = $region40
        $region39: #{tpu_custom_call.1} parent=35 // pred_region
          %237 = dma.done [#allocation7], 16
        $region40: #{tpu_custom_call.1} parent=35 // pred_fallthru
          _
        %238 = sfence
        %p239 = scmp.lt.s32.totalorder %s24, 1
        %s240 = scalar_select %p239, %s24, 1
        %p241 = scmp.lt.s32.totalorder %s25, 0
        %s242 = scalar_select %p241, %s25, 0
        %s243 = sadd.s32 %s242, %s240
        %s244 = smul.addr %s243, 8
        %s245 = scalar_lea.vmem %s0, %s244
        %p246 = pneg %p61
        %p247 = pneg %p58
        %p248 = scmp.lt.s32.totalorder %s24, 1
        %s249 = scalar_select %p248, %s24, 1
        %p250 = scmp.lt.s32.totalorder %s26, 0
        %s251 = scalar_select %p250, %s26, 0
        %s252 = smul.addr %s249, 4
        %s253 = sadd.s32 %s251, %s252
        %s254 = smul.addr %s253, 8
        %s255 = scalar_lea.vmem %s1, %s254
        %p256 = pneg %p89
        %p257 = pneg %p86
        %p258 = scmp.lt.s32.totalorder %s24, 1
        %s259 = scalar_select %p258, %s24, 1
        %p260 = scmp.lt.s32.totalorder %s26, 0
        %s261 = scalar_select %p260, %s26, 0
        %s262 = sadd.s32 %s261, %s259
        %s263 = smul.addr %s262, 8
        %s264 = scalar_lea.vmem %s2, %s263
        %p265 = pneg %p117
        %p266 = pneg %p114
        %p267 = pneg %p138
        %p268 = pneg %p135
        %p269 = pneg %p166
        %p270 = pneg %p163
        %s271 = sand.u32 %s153, 1
        %s272 = scalar_lea.sflag [#allocation6], %s271
        %s273 = sand.u32 %s153, 1
        %s274 = smul.addr %s273, 8
        %s275 = scalar_lea.vmem [#allocation8], %s274
        %p276 = scmp.lt.s32.totalorder %s24, 1
        %s277 = scalar_select %p276, %s24, 1
        %p278 = scmp.lt.s32.totalorder %s25, 0
        %s279 = scalar_select %p278, %s25, 0
        %s280 = sadd.s32 %s279, %s277
        %s281 = smul.addr %s280, 8
        %s282 = scalar_lea.vmem %s0, %s281
        %p283 = scmp.lt.s32.totalorder %s24, 1
        %s284 = scalar_select %p283, %s24, 1
        %p285 = scmp.lt.s32.totalorder %s26, 0
        %s286 = scalar_select %p285, %s26, 0
        %s287 = smul.addr %s284, 4
        %s288 = sadd.s32 %s286, %s287
        %s289 = smul.addr %s288, 8
        %s290 = scalar_lea.vmem %s1, %s289
        %p291 = scmp.lt.s32.totalorder %s24, 1
        %s292 = scalar_select %p291, %s24, 1
        %p293 = scmp.lt.s32.totalorder %s26, 0
        %s294 = scalar_select %p293, %s26, 0
        %s295 = sadd.s32 %s294, %s292
        %s296 = smul.addr %s295, 8
        %s297 = scalar_lea.vmem %s2, %s296
        %p298 = scmp.eq.s32.totalorder %s26, 0
        // Predicated region
        $region41: #{tpu_custom_call.1} parent=35 // pred_check
          %p299 = pneg %p298
        $region42: #{tpu_custom_call.1} parent=35 // pred_check_branch
          %301 = sbr.rel (%p299) target = $region44
        $region43: #{tpu_custom_call.1} parent=35 // pred_region
          %vm302 = vcmask 7168
          %303 = vst.msk [vmem:[#allocation2] sm:$0xff] %vm302, -inf
          %304 = vst.msk [vmem:[#allocation3] sm:$0xff] %vm302, 0.0
          %305 = vst [vmem:[#allocation4] sm:$0xff] 0.0
        $region44: #{tpu_custom_call.1} parent=35 // pred_fallthru
          _
        %v306 = vld [vmem:[%s282] sm:$0xff]
        %v307 = vld [vmem:[%s290] sm:$0xff]
        %v308 = vld [vmem:[%s290 + $0x8] sm:$0xff]
        %v309 = vld [vmem:[%s290 + $0x10] sm:$0xff]
        %v310 = vld [vmem:[%s290 + $0x18] sm:$0xff]
        %312 = vset.pattern.permute.xlu0 0
        %313 = vperm.xlu0 %312, %v306
        %v314 = vpop.permute.xlu0 %313
        %v316 = vlaneseq
        %v317 = vshrl.u32 %v316, 7
        %v318 = vsub.s32 0, %v317
        %v319 = vrot.slane %v307, %v318
        %v320 = vadd.f32 %v314, %v319
        %v321 = vtanh.pop %v320
        %s322 = sld [smem:[#allocation5]]
        %v323 = vstv %s322
        %v324 = vmul.f32 %v323, %v321
        %v325 = vadd.f32 %v324, 0.0
        %326 = vset.pattern.permute.xlu0 1
        %327 = vperm.xlu0 %326, %v306
        %v328 = vpop.permute.xlu0 %327
        %v330 = vlaneseq
        %v331 = vshrl.u32 %v330, 7
        %v332 = vsub.s32 1, %v331
        %v333 = vrot.slane %v307, %v332
        %v334 = vadd.f32 %v328, %v333
        %v335 = vtanh.pop %v334
        %s336 = sld [smem:[#allocation5 + $0x1]]
        %v337 = vstv %s336
        %v338 = vmul.f32 %v337, %v335
        %v339 = vadd.f32 %v325, %v338
        %340 = vset.pattern.permute.xlu0 2
        %341 = vperm.xlu0 %340, %v306
        %v342 = vpop.permute.xlu0 %341
        %v344 = vlaneseq
        %v345 = vshrl.u32 %v344, 7
        %v346 = vsub.s32 2, %v345
        %v347 = vrot.slane %v307, %v346
        %v348 = vadd.f32 %v342, %v347
        %v349 = vtanh.pop %v348
        %s350 = sld [smem:[#allocation5 + $0x2]]
        %v351 = vstv %s350
        %v352 = vmul.f32 %v351, %v349
        %v353 = vadd.f32 %v339, %v352
        %354 = vset.pattern.permute.xlu0 3
        %355 = vperm.xlu0 %354, %v306
        %v356 = vpop.permute.xlu0 %355
        %v358 = vlaneseq
        %v359 = vshrl.u32 %v358, 7
        %v360 = vsub.s32 3, %v359
        %v361 = vrot.slane %v307, %v360
        %v362 = vadd.f32 %v356, %v361
        %v363 = vtanh.pop %v362
        %s364 = sld [smem:[#allocation5 + $0x3]]
        %v365 = vstv %s364
        %v366 = vmul.f32 %v365, %v363
        %v367 = vadd.f32 %v353, %v366
        %368 = vset.pattern.permute.xlu0 4
        %369 = vperm.xlu0 %368, %v306
        %v370 = vpop.permute.xlu0 %369
        %v372 = vlaneseq
        %v373 = vshrl.u32 %v372, 7
        %v374 = vsub.s32 4, %v373
        %v375 = vrot.slane %v307, %v374
        %v376 = vadd.f32 %v370, %v375
        %v377 = vtanh.pop %v376
        %s378 = sld [smem:[#allocation5 + $0x4]]
        %v379 = vstv %s378
        %v380 = vmul.f32 %v379, %v377
        %v381 = vadd.f32 %v367, %v380
        %382 = vset.pattern.permute.xlu0 5
        %383 = vperm.xlu0 %382, %v306
        %v384 = vpop.permute.xlu0 %383
        %v386 = vlaneseq
        %v387 = vshrl.u32 %v386, 7
        %v388 = vsub.s32 5, %v387
        %v389 = vrot.slane %v307, %v388
        %v390 = vadd.f32 %v384, %v389
        %v391 = vtanh.pop %v390
        %s392 = sld [smem:[#allocation5 + $0x5]]
        %v393 = vstv %s392
        %v394 = vmul.f32 %v393, %v391
        %v395 = vadd.f32 %v381, %v394
        %396 = vset.pattern.permute.xlu0 6
        %397 = vperm.xlu0 %396, %v306
        %v398 = vpop.permute.xlu0 %397
        %v400 = vlaneseq
        %v401 = vshrl.u32 %v400, 7
        %v402 = vsub.s32 6, %v401
        %v403 = vrot.slane %v307, %v402
        %v404 = vadd.f32 %v398, %v403
        %v405 = vtanh.pop %v404
        %s406 = sld [smem:[#allocation5 + $0x6]]
        %v407 = vstv %s406
        %v408 = vmul.f32 %v407, %v405
        %v409 = vadd.f32 %v395, %v408
        %410 = vset.pattern.permute.xlu0 7
        %411 = vperm.xlu0 %410, %v306
        %v412 = vpop.permute.xlu0 %411
        %v414 = vlaneseq
        %v415 = vshrl.u32 %v414, 7
        %v416 = vsub.s32 7, %v415
        %v417 = vrot.slane %v307, %v416
        %v418 = vadd.f32 %v412, %v417
        %v419 = vtanh.pop %v418
        %s420 = sld [smem:[#allocation5 + $0x7]]
        %v421 = vstv %s420
        %v422 = vmul.f32 %v421, %v419
        %v423 = vadd.f32 %v409, %v422
        %424 = vset.pattern.permute.xlu0 8
        %425 = vperm.xlu0 %424, %v306
        %v426 = vpop.permute.xlu0 %425
        %v428 = vlaneseq
        %v429 = vshrl.u32 %v428, 7
        %v430 = vsub.s32 0, %v429
        %v431 = vrot.slane %v308, %v430
        %v432 = vadd.f32 %v426, %v431
        %v433 = vtanh.pop %v432
        %s434 = sld [smem:[#allocation5 + $0x8]]
        %v435 = vstv %s434
        %v436 = vmul.f32 %v435, %v433
        %v437 = vadd.f32 %v423, %v436
        %438 = vset.pattern.permute.xlu0 9
        %439 = vperm.xlu0 %438, %v306
        %v440 = vpop.permute.xlu0 %439
        %v442 = vlaneseq
        %v443 = vshrl.u32 %v442, 7
        %v444 = vsub.s32 1, %v443
        %v445 = vrot.slane %v308, %v444
        %v446 = vadd.f32 %v440, %v445
        %v447 = vtanh.pop %v446
        %s448 = sld [smem:[#allocation5 + $0x9]]
        %v449 = vstv %s448
        %v450 = vmul.f32 %v449, %v447
        %v451 = vadd.f32 %v437, %v450
        %452 = vset.pattern.permute.xlu0 10
        %453 = vperm.xlu0 %452, %v306
        %v454 = vpop.permute.xlu0 %453
        %v456 = vlaneseq
        %v457 = vshrl.u32 %v456, 7
        %v458 = vsub.s32 2, %v457
        %v459 = vrot.slane %v308, %v458
        %v460 = vadd.f32 %v454, %v459
        %v461 = vtanh.pop %v460
        %s462 = sld [smem:[#allocation5 + $0xa]]
        %v463 = vstv %s462
        %v464 = vmul.f32 %v463, %v461
        %v465 = vadd.f32 %v451, %v464
        %466 = vset.pattern.permute.xlu0 11
        %467 = vperm.xlu0 %466, %v306
        %v468 = vpop.permute.xlu0 %467
        %v470 = vlaneseq
        %v471 = vshrl.u32 %v470, 7
        %v472 = vsub.s32 3, %v471
        %v473 = vrot.slane %v308, %v472
        %v474 = vadd.f32 %v468, %v473
        %v475 = vtanh.pop %v474
        %s476 = sld [smem:[#allocation5 + $0xb]]
        %v477 = vstv %s476
        %v478 = vmul.f32 %v477, %v475
        %v479 = vadd.f32 %v465, %v478
        %480 = vset.pattern.permute.xlu0 12
        %481 = vperm.xlu0 %480, %v306
        %v482 = vpop.permute.xlu0 %481
        %v484 = vlaneseq
        %v485 = vshrl.u32 %v484, 7
        %v486 = vsub.s32 4, %v485
        %v487 = vrot.slane %v308, %v486
        %v488 = vadd.f32 %v482, %v487
        %v489 = vtanh.pop %v488
        %s490 = sld [smem:[#allocation5 + $0xc]]
        %v491 = vstv %s490
        %v492 = vmul.f32 %v491, %v489
        %v493 = vadd.f32 %v479, %v492
        %494 = vset.pattern.permute.xlu0 13
        %495 = vperm.xlu0 %494, %v306
        %v496 = vpop.permute.xlu0 %495
        %v498 = vlaneseq
        %v499 = vshrl.u32 %v498, 7
        %v500 = vsub.s32 5, %v499
        %v501 = vrot.slane %v308, %v500
        %v502 = vadd.f32 %v496, %v501
        %v503 = vtanh.pop %v502
        %s504 = sld [smem:[#allocation5 + $0xd]]
        %v505 = vstv %s504
        %v506 = vmul.f32 %v505, %v503
        %v507 = vadd.f32 %v493, %v506
        %508 = vset.pattern.permute.xlu0 14
        %509 = vperm.xlu0 %508, %v306
        %v510 = vpop.permute.xlu0 %509
        %v512 = vlaneseq
        %v513 = vshrl.u32 %v512, 7
        %v514 = vsub.s32 6, %v513
        %v515 = vrot.slane %v308, %v514
        %v516 = vadd.f32 %v510, %v515
        %v517 = vtanh.pop %v516
        %s518 = sld [smem:[#allocation5 + $0xe]]
        %v519 = vstv %s518
        %v520 = vmul.f32 %v519, %v517
        %v521 = vadd.f32 %v507, %v520
        %522 = vset.pattern.permute.xlu0 15
        %523 = vperm.xlu0 %522, %v306
        %v524 = vpop.permute.xlu0 %523
        %v526 = vlaneseq
        %v527 = vshrl.u32 %v526, 7
        %v528 = vsub.s32 7, %v527
        %v529 = vrot.slane %v308, %v528
        %v530 = vadd.f32 %v524, %v529
        %v531 = vtanh.pop %v530
        %s532 = sld [smem:[#allocation5 + $0xf]]
        %v533 = vstv %s532
        %v534 = vmul.f32 %v533, %v531
        %v535 = vadd.f32 %v521, %v534
        %536 = vset.pattern.permute.xlu0 16
        %537 = vperm.xlu0 %536, %v306
        %v538 = vpop.permute.xlu0 %537
        %v540 = vlaneseq
        %v541 = vshrl.u32 %v540, 7
        %v542 = vsub.s32 0, %v541
        %v543 = vrot.slane %v309, %v542
        %v544 = vadd.f32 %v538, %v543
        %v545 = vtanh.pop %v544
        %s546 = sld [smem:[#allocation5 + $0x10]]
        %v547 = vstv %s546
        %v548 = vmul.f32 %v547, %v545
        %v549 = vadd.f32 %v535, %v548
        %550 = vset.pattern.permute.xlu0 17
        %551 = vperm.xlu0 %550, %v306
        %v552 = vpop.permute.xlu0 %551
        %v554 = vlaneseq
        %v555 = vshrl.u32 %v554, 7
        %v556 = vsub.s32 1, %v555
        %v557 = vrot.slane %v309, %v556
        %v558 = vadd.f32 %v552, %v557
        %v559 = vtanh.pop %v558
        %s560 = sld [smem:[#allocation5 + $0x11]]
        %v561 = vstv %s560
        %v562 = vmul.f32 %v561, %v559
        %v563 = vadd.f32 %v549, %v562
        %564 = vset.pattern.permute.xlu0 18
        %565 = vperm.xlu0 %564, %v306
        %v566 = vpop.permute.xlu0 %565
        %v568 = vlaneseq
        %v569 = vshrl.u32 %v568, 7
        %v570 = vsub.s32 2, %v569
        %v571 = vrot.slane %v309, %v570
        %v572 = vadd.f32 %v566, %v571
        %v573 = vtanh.pop %v572
        %s574 = sld [smem:[#allocation5 + $0x12]]
        %v575 = vstv %s574
        %v576 = vmul.f32 %v575, %v573
        %v577 = vadd.f32 %v563, %v576
        %578 = vset.pattern.permute.xlu0 19
        %579 = vperm.xlu0 %578, %v306
        %v580 = vpop.permute.xlu0 %579
        %v582 = vlaneseq
        %v583 = vshrl.u32 %v582, 7
        %v584 = vsub.s32 3, %v583
        %v585 = vrot.slane %v309, %v584
        %v586 = vadd.f32 %v580, %v585
        %v587 = vtanh.pop %v586
        %s588 = sld [smem:[#allocation5 + $0x13]]
        %v589 = vstv %s588
        %v590 = vmul.f32 %v589, %v587
        %v591 = vadd.f32 %v577, %v590
        %592 = vset.pattern.permute.xlu0 20
        %593 = vperm.xlu0 %592, %v306
        %v594 = vpop.permute.xlu0 %593
        %v596 = vlaneseq
        %v597 = vshrl.u32 %v596, 7
        %v598 = vsub.s32 4, %v597
        %v599 = vrot.slane %v309, %v598
        %v600 = vadd.f32 %v594, %v599
        %v601 = vtanh.pop %v600
        %s602 = sld [smem:[#allocation5 + $0x14]]
        %v603 = vstv %s602
        %v604 = vmul.f32 %v603, %v601
        %v605 = vadd.f32 %v591, %v604
        %606 = vset.pattern.permute.xlu0 21
        %607 = vperm.xlu0 %606, %v306
        %v608 = vpop.permute.xlu0 %607
        %v610 = vlaneseq
        %v611 = vshrl.u32 %v610, 7
        %v612 = vsub.s32 5, %v611
        %v613 = vrot.slane %v309, %v612
        %v614 = vadd.f32 %v608, %v613
        %v615 = vtanh.pop %v614
        %s616 = sld [smem:[#allocation5 + $0x15]]
        %v617 = vstv %s616
        %v618 = vmul.f32 %v617, %v615
        %v619 = vadd.f32 %v605, %v618
        %620 = vset.pattern.permute.xlu0 22
        %621 = vperm.xlu0 %620, %v306
        %v622 = vpop.permute.xlu0 %621
        %v624 = vlaneseq
        %v625 = vshrl.u32 %v624, 7
        %v626 = vsub.s32 6, %v625
        %v627 = vrot.slane %v309, %v626
        %v628 = vadd.f32 %v622, %v627
        %v629 = vtanh.pop %v628
        %s630 = sld [smem:[#allocation5 + $0x16]]
        %v631 = vstv %s630
        %v632 = vmul.f32 %v631, %v629
        %v633 = vadd.f32 %v619, %v632
        %634 = vset.pattern.permute.xlu0 23
        %635 = vperm.xlu0 %634, %v306
        %v636 = vpop.permute.xlu0 %635
        %v638 = vlaneseq
        %v639 = vshrl.u32 %v638, 7
        %v640 = vsub.s32 7, %v639
        %v641 = vrot.slane %v309, %v640
        %v642 = vadd.f32 %v636, %v641
        %v643 = vtanh.pop %v642
        %s644 = sld [smem:[#allocation5 + $0x17]]
        %v645 = vstv %s644
        %v646 = vmul.f32 %v645, %v643
        %v647 = vadd.f32 %v633, %v646
        %648 = vset.pattern.permute.xlu0 24
        %649 = vperm.xlu0 %648, %v306
        %v650 = vpop.permute.xlu0 %649
        %v652 = vlaneseq
        %v653 = vshrl.u32 %v652, 7
        %v654 = vsub.s32 0, %v653
        %v655 = vrot.slane %v310, %v654
        %v656 = vadd.f32 %v650, %v655
        %v657 = vtanh.pop %v656
        %s658 = sld [smem:[#allocation5 + $0x18]]
        %v659 = vstv %s658
        %v660 = vmul.f32 %v659, %v657
        %v661 = vadd.f32 %v647, %v660
        %662 = vset.pattern.permute.xlu0 25
        %663 = vperm.xlu0 %662, %v306
        %v664 = vpop.permute.xlu0 %663
        %v666 = vlaneseq
        %v667 = vshrl.u32 %v666, 7
        %v668 = vsub.s32 1, %v667
        %v669 = vrot.slane %v310, %v668
        %v670 = vadd.f32 %v664, %v669
        %v671 = vtanh.pop %v670
        %s672 = sld [smem:[#allocation5 + $0x19]]
        %v673 = vstv %s672
        %v674 = vmul.f32 %v673, %v671
        %v675 = vadd.f32 %v661, %v674
        %676 = vset.pattern.permute.xlu0 26
        %677 = vperm.xlu0 %676, %v306
        %v678 = vpop.permute.xlu0 %677
        %v680 = vlaneseq
        %v681 = vshrl.u32 %v680, 7
        %v682 = vsub.s32 2, %v681
        %v683 = vrot.slane %v310, %v682
        %v684 = vadd.f32 %v678, %v683
        %v685 = vtanh.pop %v684
        %s686 = sld [smem:[#allocation5 + $0x1a]]
        %v687 = vstv %s686
        %v688 = vmul.f32 %v687, %v685
        %v689 = vadd.f32 %v675, %v688
        %690 = vset.pattern.permute.xlu0 27
        %691 = vperm.xlu0 %690, %v306
        %v692 = vpop.permute.xlu0 %691
        %v694 = vlaneseq
        %v695 = vshrl.u32 %v694, 7
        %v696 = vsub.s32 3, %v695
        %v697 = vrot.slane %v310, %v696
        %v698 = vadd.f32 %v692, %v697
        %v699 = vtanh.pop %v698
        %s700 = sld [smem:[#allocation5 + $0x1b]]
        %v701 = vstv %s700
        %v702 = vmul.f32 %v701, %v699
        %v703 = vadd.f32 %v689, %v702
        %704 = vset.pattern.permute.xlu0 28
        %705 = vperm.xlu0 %704, %v306
        %v706 = vpop.permute.xlu0 %705
        %v708 = vlaneseq
        %v709 = vshrl.u32 %v708, 7
        %v710 = vsub.s32 4, %v709
        %v711 = vrot.slane %v310, %v710
        %v712 = vadd.f32 %v706, %v711
        %v713 = vtanh.pop %v712
        %s714 = sld [smem:[#allocation5 + $0x1c]]
        %v715 = vstv %s714
        %v716 = vmul.f32 %v715, %v713
        %v717 = vadd.f32 %v703, %v716
        %718 = vset.pattern.permute.xlu0 29
        %719 = vperm.xlu0 %718, %v306
        %v720 = vpop.permute.xlu0 %719
        %v722 = vlaneseq
        %v723 = vshrl.u32 %v722, 7
        %v724 = vsub.s32 5, %v723
        %v725 = vrot.slane %v310, %v724
        %v726 = vadd.f32 %v720, %v725
        %v727 = vtanh.pop %v726
        %s728 = sld [smem:[#allocation5 + $0x1d]]
        %v729 = vstv %s728
        %v730 = vmul.f32 %v729, %v727
        %v731 = vadd.f32 %v717, %v730
        %732 = vset.pattern.permute.xlu0 30
        %733 = vperm.xlu0 %732, %v306
        %v734 = vpop.permute.xlu0 %733
        %v736 = vlaneseq
        %v737 = vshrl.u32 %v736, 7
        %v738 = vsub.s32 6, %v737
        %v739 = vrot.slane %v310, %v738
        %v740 = vadd.f32 %v734, %v739
        %v741 = vtanh.pop %v740
        %s742 = sld [smem:[#allocation5 + $0x1e]]
        %v743 = vstv %s742
        %v744 = vmul.f32 %v743, %v741
        %v745 = vadd.f32 %v731, %v744
        %746 = vset.pattern.permute.xlu0 31
        %747 = vperm.xlu0 %746, %v306
        %v748 = vpop.permute.xlu0 %747
        %v750 = vlaneseq
        %v751 = vshrl.u32 %v750, 7
        %v752 = vsub.s32 7, %v751
        %v753 = vrot.slane %v310, %v752
        %v754 = vadd.f32 %v748, %v753
        %v755 = vtanh.pop %v754
        %s756 = sld [smem:[#allocation5 + $0x1f]]
        %v757 = vstv %s756
        %v758 = vmul.f32 %v757, %v755
        %v759 = vadd.f32 %v745, %v758
        %v760 = vld [vmem:[#allocation2] sm:$0xff]
        %vm761 = vcmask 64512
        %v762 = vsel %vm761, %v759, -inf
        %763 = vmax.xlane.f32.xlu0 %v762
        %v764 = vpop.xlane.xlu0 %763
        %v765 = vmax.f32 %v760, %v764
        %v766 = vsub.f32 %v760, %v765
        %v767 = vmul.f32 %v766, 1.442695
        %v768 = vpow.pop %v767
        %770 = vset.pattern.permute.xlu0 0
        %771 = vperm.xlu0 %770, %v765
        %v772 = vpop.permute.xlu0 %771
        %v774 = vsub.f32 %v759, %v772
        %v775 = vmul.f32 %v774, 1.442695
        %v776 = vpow.pop %v775
        %v777 = vld [vmem:[#allocation3] sm:$0xff]
        %v778 = vmul.f32 %v768, %v777
        %v779 = vsel %vm761, %v776, 0.0
        %780 = vadd.xlane.f32.xlu0 %v779
        %v781 = vpop.xlane.xlu0 %780
        %v782 = vadd.f32 %v778, %v781
        %vm783 = vcmask 7168
        %784 = vst.msk [vmem:[#allocation3] sm:$0xff] %vm783, %v782
        %v785 = vld [vmem:[%s297] sm:$0xff]
        %v786 = vld [vmem:[#allocation4] sm:$0xff]
        %788 = vset.pattern.permute.xlu0 0
        %789 = vperm.xlu0 %788, %v768
        %v790 = vpop.permute.xlu0 %789
        %v792 = vmul.f32 %v790, %v786
        %v794 = vsel %vm761, %v776, 0
        %796 = vmatprep.subr.mxu0 0.0
        %797 = vmatpush1.msra.mxu0 0.0
        %798 = vmatprep.subr.mxu0 0.0
        %799 = vmatpush1.msra.mxu0 0.0
        %800 = vmatprep.subr.mxu0 0.0
        %801 = vmatpush1.msra.mxu0 0.0
        %802 = vmatprep.subr.mxu0 0.0
        %803 = vmatpush1.msra.mxu0 0.0
        %804 = vmatprep.subr.mxu0 0.0
        %805 = vmatpush1.msra.mxu0 0.0
        %806 = vmatprep.subr.mxu0 0.0
        %807 = vmatpush1.msra.mxu0 0.0
        %808 = vmatprep.subr.mxu0 0.0
        %809 = vmatpush1.msra.mxu0 0.0
        %810 = vmatprep.subr.mxu0 0.0
        %811 = vmatpush1.msra.mxu0 0.0
        %812 = vmatprep.subr.mxu0 0.0
        %813 = vmatpush1.msra.mxu0 0.0
        %814 = vmatprep.subr.mxu0 0.0
        %815 = vmatpush1.msra.mxu0 0.0
        %816 = vmatprep.subr.mxu0 0.0
        %817 = vmatpush1.msra.mxu0 0.0
        %818 = vmatprep.subr.mxu0 0.0
        %819 = vmatpush1.msra.mxu0 0.0
        %820 = vmatprep.subr.mxu0 0.0
        %821 = vmatpush1.msra.mxu0 0.0
        %822 = vmatprep.subr.mxu0 0.0
        %823 = vmatpush1.msra.mxu0 0.0
        %824 = vmatprep.subr.mxu0 0.0
        %825 = vmatpush1.msra.mxu0 0.0
        %826 = vmatprep.subr.mxu0 0.0
        %827 = vmatpush1.msra.mxu0 %v785
        %828 = vmatprep.subr.mxu0 0.0
        %829 = vmatpush2.msra.mxu0 0.0
        %830 = vmatprep.subr.mxu0 0.0
        %831 = vmatpush2.msra.mxu0 0.0
        %832 = vmatprep.subr.mxu0 0.0
        %833 = vmatpush2.msra.mxu0 0.0
        %834 = vmatprep.subr.mxu0 0.0
        %835 = vmatpush2.msra.mxu0 0.0
        %836 = vmatprep.subr.mxu0 0.0
        %837 = vmatpush2.msra.mxu0 0.0
        %838 = vmatprep.subr.mxu0 0.0
        %839 = vmatpush2.msra.mxu0 0.0
        %840 = vmatprep.subr.mxu0 0.0
        %841 = vmatpush2.msra.mxu0 0.0
        %842 = vmatprep.subr.mxu0 0.0
        %843 = vmatpush2.msra.mxu0 0.0
        %844 = vmatprep.subr.mxu0 0.0
        %845 = vmatpush2.msra.mxu0 0.0
        %846 = vmatprep.subr.mxu0 0.0
        %847 = vmatpush2.msra.mxu0 0.0
        %848 = vmatprep.subr.mxu0 0.0
        %849 = vmatpush2.msra.mxu0 0.0
        %850 = vmatprep.subr.mxu0 0.0
        %851 = vmatpush2.msra.mxu0 0.0
        %852 = vmatprep.subr.mxu0 0.0
        %853 = vmatpush2.msra.mxu0 0.0
        %854 = vmatprep.subr.mxu0 0.0
        %855 = vmatpush2.msra.mxu0 0.0
        %856 = vmatprep.subr.mxu0 0.0
        %857 = vmatpush2.msra.mxu0 0.0
        %858 = vmatprep.subr.mxu0 0.0
        %859 = vmatpush2.msra.mxu0 0.0
        %860 = vmatprep.mubr.f32.mxu0 0.0
        %861 = vmatmul.mubr.f32.gmra.mxu0 %v794
        %v862 = vpop.f32.mrf.mxu0
        %v863 = vadd.f32 0.0, %v862
        %v864 = vpop.f32.mrf.mxu0
        %865 = vdwg.mxu0
        %v866 = vadd.f32 %v792, %v863
        %867 = vst [vmem:[#allocation4] sm:$0xff] %v866
        %868 = vst.msk [vmem:[#allocation2] sm:$0xff] %vm783, %v765
        // Predicated region
        $region45: #{tpu_custom_call.1} parent=35 // pred_check
          %p869 = pneg %p298
        $region46: #{tpu_custom_call.1} parent=35 // pred_check_branch
          %871 = sbr.rel (%p869) target = $region48
        $region47: #{tpu_custom_call.1} parent=35 // pred_region
          %v872 = vld [vmem:[#allocation3] sm:$0xff]
          %v873 = vrcp.pop %v872
          %v874 = vld [vmem:[#allocation4] sm:$0xff]
          %876 = vset.pattern.permute.xlu0 0
          %877 = vperm.xlu0 %876, %v873
          %v878 = vpop.permute.xlu0 %877
          %v880 = vmul.f32 %v874, %v878
          %881 = vst [vmem:[%s275] sm:$0xff] %v880
        $region48: #{tpu_custom_call.1} parent=35 // pred_fallthru
          _
        %s882 = sand.u32 %s153, 1
        %s883 = scalar_lea.sflag [#allocation6], %s882
        %s884 = sand.u32 %s153, 1
        %s885 = smul.addr %s884, 8
        %s886 = scalar_lea.vmem [#allocation8], %s885
        // Predicated region
        $region49: #{tpu_custom_call.1} parent=35 // pred_check
          %p887 = pneg %p163
        $region50: #{tpu_custom_call.1} parent=35 // pred_check_branch
          %889 = sbr.rel (%p887) target = $region52
        $region51: #{tpu_custom_call.1} parent=35 // pred_region
          %s891 = ssub.s32 128, 128
          %892 = vsyncadd %s883, %s891
          %s893 = sadd.s32 %s25, %s24
          %s894 = smul.addr %s893, 128
          %s895 = scalar_lea.hbm %s4, %s894
          %s897 = sshll.u32 %s886, 4
          %s898 = int_to_ptr.vmem [resolvable:$true] %s897
          %900 = dma.vmem_to_hbm [thread:$0]  %s898, 128, %s895, %s883
        $region52: #{tpu_custom_call.1} parent=35 // pred_fallthru
          _
      $region36: #{tpu_custom_call.1} parent=5 // pred_fallthru
        _
      %p901 = scmp.le.s32.totalorder 2, %s14
      // Predicated region
      $region53: #{tpu_custom_call.1} parent=5 // pred_check
        %p902 = pneg %p901
      $region54: #{tpu_custom_call.1} parent=5 // pred_check_branch
        %904 = sbr.rel (%p902) target = $region56
      $region55: #{tpu_custom_call.1} parent=5 // pred_region
        %s905 = ssub.s32 %s14, 2
        // Predicated region
        $region57: #{tpu_custom_call.1} parent=55 // pred_check
          %p906 = pneg %p169
        $region58: #{tpu_custom_call.1} parent=55 // pred_check_branch
          %908 = sbr.rel (%p906) target = $region60
        $region59: #{tpu_custom_call.1} parent=55 // pred_region
          %s909 = sand.u32 %s154, 1
          %s910 = scalar_lea.sflag [#allocation6], %s909
          %s911 = sand.u32 %s154, 1
          %s912 = smul.addr %s911, 8
          %s913 = scalar_lea.vmem [#allocation8], %s912
          %914 = dma.done %s910, 128
        $region60: #{tpu_custom_call.1} parent=55 // pred_fallthru
          _
      $region56: #{tpu_custom_call.1} parent=5 // pred_fallthru
        _
    $region6: #{tpu_custom_call.1} parent=1 // loop_footer
      %s18 = sadd.s32 1, %s14
    $region7: #{tpu_custom_call.1} parent=1 // loop_footer_branch
      %13 = sbr.rel target = $region3
    $region8: #{tpu_custom_call.1} parent=1 // loop_exit
      _
    %915 = vsyncpa [#allocation6], 1
    %s916 = scalar_lea.sflag [#allocation6], 1
    %917 = vsyncpa %s916, 1
    %918 = vsyncpa [#allocation7], 1
    %s919 = scalar_lea.sflag [#allocation7], 1
    %920 = vsyncpa %s919, 1

</llo_original>
